<compile_context>
chip_gen: v6e
topology: v6e:2x2x1
jax: 0.10.0
libtpu: 0.0.40
codegen_flags: <defaults>
</compile_context>

<pallas_src>
import functools

import jax
import jax.numpy as jnp
from jax.experimental import pallas as pl
from jax.experimental.pallas import tpu as pltpu


def _round_up(x, m):
    return (x + m - 1) // m * m


def _conv_bn_relu_kernel(x0_ref, x1_ref, x2_ref, w_ref, scale_ref, bias_ref,
                         o_ref, *, H, W, C, KS):
    """One output depth plane: implicit-GEMM 3x3x3 conv + folded BN + ReLU.

    x{0,1,2}_ref : (Hp, Wp, C)       padded input planes at depth d+0, d+1, d+2
    w_ref        : (KS^3*C, outc_p)  flattened weights (tap-major, c-minor)
    scale_ref    : (1, outc_p)       folded BatchNorm scale
    bias_ref     : (1, outc_p)       folded BatchNorm bias
    o_ref        : (H*W, outc_p)
    """
    planes = (x0_ref, x1_ref, x2_ref)
    cols = []
    for kd in range(KS):
        for kh in range(KS):
            for kw in range(KS):
                # Static halo slice of the resident plane -> (H, W, C).
                cols.append(planes[kd][kh:kh + H, kw:kw + W, :])
    patch = jnp.concatenate(cols, axis=-1)              # (H, W, KS^3*C) in VMEM
    patch = patch.reshape(H * W, KS * KS * KS * C)      # GEMM lhs
    acc = jnp.dot(patch, w_ref[...], preferred_element_type=jnp.float32)
    y = acc * scale_ref[...] + bias_ref[...]            # BN epilogue in f32
    o_ref[...] = jnp.maximum(y, 0.0).astype(o_ref.dtype)


def basic_convolution_block(x, weight, gamma, beta, running_mean, running_var,
                            eps=1e-5, compute_dtype=jnp.bfloat16,
                            channels_last_output=False):
    """x: (N, C, D, H, W). weight: (outc, inc, ks, ks, ks) with ks=3, stride=1."""
    N, C, D, H, W = x.shape
    outc, inc, KS, _, _ = weight.shape
    assert inc == C and KS == 3
    pad = KS // 2
    Hp, Wp = H + 2 * pad, W + 2 * pad
    K = KS * KS * KS * C
    outc_p = _round_up(outc, 128)                 # lane-dense output columns

    # --- glue (single cheap pass): NCDHW -> NDHWC, halo pad, dtype cast ---
    x_cl = jnp.transpose(x, (0, 2, 3, 4, 1)).astype(compute_dtype)
    xp = jnp.pad(x_cl, ((0, 0), (pad, pad), (pad, pad), (pad, pad), (0, 0)))

    # weight (outc, inc, kd, kh, kw) -> (kd, kh, kw, c, outc) -> (K, outc_p).
    w_flat = weight.transpose(2, 3, 4, 1, 0).reshape(K, outc)
    w_flat = jnp.pad(w_flat, ((0, 0), (0, outc_p - outc))).astype(compute_dtype)

    # Fold BatchNorm (inference stats) into scale/bias, padded to outc_p.
    scale = (gamma / jnp.sqrt(running_var + eps)).astype(jnp.float32)
    bias = (beta - running_mean * scale).astype(jnp.float32)
    scale2 = jnp.pad(scale, (0, outc_p - outc)).reshape(1, outc_p)
    bias2 = jnp.pad(bias, (0, outc_p - outc)).reshape(1, outc_p)

    # One blocked (never element-offset) spec per depth tap; (kh, kw) halo
    # shifts are static slices inside the kernel.
    def _make_x_index_map(kd):
        def index_map(n, d):
            return (n, d + kd, 0, 0, 0)
        return index_map

    def x_spec(kd):
        return pl.BlockSpec((None, None, Hp, Wp, C), _make_x_index_map(kd))

    kernel = functools.partial(_conv_bn_relu_kernel, H=H, W=W, C=C, KS=KS)

    flops = 2 * N * D * H * W * K * outc_p
    bytes_accessed = (3 * xp.size * xp.dtype.itemsize
                      + w_flat.size * w_flat.dtype.itemsize
                      + N * D * H * W * outc_p * 4)

    out = pl.pallas_call(
        kernel,
        out_shape=jax.ShapeDtypeStruct((N, D, H * W, outc_p), jnp.float32),
        grid_spec=pltpu.PrefetchScalarGridSpec(
            num_scalar_prefetch=0,
            grid=(N, D),
            in_specs=[
                x_spec(0), x_spec(1), x_spec(2),
                pl.BlockSpec((K, outc_p), lambda n, d: (0, 0)),   # weights
                pl.BlockSpec((1, outc_p), lambda n, d: (0, 0)),   # BN scale
                pl.BlockSpec((1, outc_p), lambda n, d: (0, 0)),   # BN bias
            ],
            out_specs=pl.BlockSpec((None, None, H * W, outc_p),
                                   lambda n, d: (n, d, 0, 0)),
        ),
        compiler_params=pltpu.CompilerParams(
            dimension_semantics=("parallel", "parallel")),
        cost_estimate=pl.CostEstimate(flops=flops, transcendentals=0,
                                      bytes_accessed=bytes_accessed),
    )(xp, xp, xp, w_flat, scale2, bias2)

    out = out.reshape(N, D, H, W, outc_p)[..., :outc]    # drop lane padding
    if channels_last_output:
        return out                                       # NDHWC, no transpose
    return jnp.transpose(out, (0, 4, 1, 2, 3))           # NCDHW (PyTorch layout)


def _reference(x, weight, gamma, beta, running_mean, running_var, eps=1e-5):
    y = jax.lax.conv_general_dilated(
        x, weight, window_strides=(1, 1, 1), padding="SAME",
        dimension_numbers=("NCDHW", "OIDHW", "NCDHW"))
    sh = (1, -1, 1, 1, 1)
    y = (y - running_mean.reshape(sh)) / jnp.sqrt(running_var.reshape(sh) + eps)
    y = y * gamma.reshape(sh) + beta.reshape(sh)
    return jnp.maximum(y, 0.0)


if __name__ == "__main__":
    key = jax.random.PRNGKey(0)
    k_x, k_w, k_g, k_b, k_m, k_v = jax.random.split(key, 6)

    N, inc, outc, D, H, W, KS = 2, 4, 8, 8, 8, 8, 3
    x = jax.random.normal(k_x, (N, inc, D, H, W), dtype=jnp.float32)
    weight = jax.random.normal(k_w, (outc, inc, KS, KS, KS), dtype=jnp.float32) * 0.1
    gamma = 1.0 + 0.1 * jax.random.normal(k_g, (outc,), dtype=jnp.float32)
    beta = 0.1 * jax.random.normal(k_b, (outc,), dtype=jnp.float32)
    running_mean = 0.1 * jax.random.normal(k_m, (outc,), dtype=jnp.float32)
    running_var = jnp.abs(jax.random.normal(k_v, (outc,), dtype=jnp.float32)) + 0.5

    ref = _reference(x, weight, gamma, beta, running_mean, running_var)

    # Exact path (f32 MXU operands): must match the XLA reference tightly.
    out_f32 = basic_convolution_block(
        x, weight, gamma, beta, running_mean, running_var,
        compute_dtype=jnp.float32)
    out_f32 = jax.block_until_ready(out_f32)
    assert out_f32.shape == (N, outc, D, H, W)
    assert jnp.allclose(out_f32, ref, rtol=1e-4, atol=1e-4), "f32 mismatch vs reference"

    # Fast path (bf16 MXU operands, f32 accumulation + f32 BN/ReLU epilogue).
    out_bf16 = basic_convolution_block(
        x, weight, gamma, beta, running_mean, running_var,
        compute_dtype=jnp.bfloat16)
    out_bf16 = jax.block_until_ready(out_bf16)
    assert out_bf16.shape == (N, outc, D, H, W)
    assert jnp.allclose(out_bf16, ref, rtol=5e-2, atol=5e-2), "bf16 mismatch vs reference"

    print("KERNEL_OK")
</pallas_src>

<mosaic_0001>
module attributes {stable_mosaic.version = 11 : i64} {
  func.func @_conv_bn_relu_kernel(%arg0: i32, %arg1: i32, %arg2: memref<1x1x10x10x4xf32, #tpu.memory_space<vmem>>, %arg3: memref<1x1x10x10x4xf32, #tpu.memory_space<vmem>>, %arg4: memref<1x1x10x10x4xf32, #tpu.memory_space<vmem>>, %arg5: memref<108x128xf32, #tpu.memory_space<vmem>>, %arg6: memref<1x128xf32, #tpu.memory_space<vmem>>, %arg7: memref<1x128xf32, #tpu.memory_space<vmem>>, %arg8: memref<1x1x64x128xf32, #tpu.memory_space<vmem>>) attributes {dimension_semantics = [#tpu.dimension_semantics<parallel>, #tpu.dimension_semantics<parallel>], iteration_bounds = array<i64: 2, 8>, scalar_prefetch = 0 : i64, scratch_operands = 0 : i64, tpu.core_type = #tpu.core_type<tc>, window_params = [{transform_indices = @transform_0, window_bounds = array<i64: 1, 1, 10, 10, 4>}, {transform_indices = @transform_1, window_bounds = array<i64: 1, 1, 10, 10, 4>}, {transform_indices = @transform_2, window_bounds = array<i64: 1, 1, 10, 10, 4>}, {pipeline_mode = #tpu.pipeline_mode<synchronous>, transform_indices = @transform_3, window_bounds = array<i64: 108, 128>}, {pipeline_mode = #tpu.pipeline_mode<synchronous>, transform_indices = @transform_4, window_bounds = array<i64: 1, 128>}, {pipeline_mode = #tpu.pipeline_mode<synchronous>, transform_indices = @transform_5, window_bounds = array<i64: 1, 128>}, {transform_indices = @transform_6, window_bounds = array<i64: 1, 1, 64, 128>}]} {
    %c0 = arith.constant 0 : index
    %c0_0 = arith.constant 0 : index
    %c0_1 = arith.constant 0 : index
    %c0_2 = arith.constant 0 : index
    %c0_3 = arith.constant 0 : index
    %0 = vector.load %arg2[%c0, %c0_0, %c0_1, %c0_2, %c0_3] : memref<1x1x10x10x4xf32, #tpu.memory_space<vmem>>, vector<1x1x8x8x4xf32>
    %1 = vector.shape_cast %0 : vector<1x1x8x8x4xf32> to vector<8x8x4xf32>
    %c0_4 = arith.constant 0 : index
    %c0_5 = arith.constant 0 : index
    %c0_6 = arith.constant 0 : index
    %c1 = arith.constant 1 : index
    %c0_7 = arith.constant 0 : index
    %2 = vector.load %arg2[%c0_4, %c0_5, %c0_6, %c1, %c0_7] : memref<1x1x10x10x4xf32, #tpu.memory_space<vmem>>, vector<1x1x8x8x4xf32>
    %3 = vector.shape_cast %2 : vector<1x1x8x8x4xf32> to vector<8x8x4xf32>
    %c0_8 = arith.constant 0 : index
    %c0_9 = arith.constant 0 : index
    %c0_10 = arith.constant 0 : index
    %c2 = arith.constant 2 : index
    %c0_11 = arith.constant 0 : index
    %4 = vector.load %arg2[%c0_8, %c0_9, %c0_10, %c2, %c0_11] : memref<1x1x10x10x4xf32, #tpu.memory_space<vmem>>, vector<1x1x8x8x4xf32>
    %5 = vector.shape_cast %4 : vector<1x1x8x8x4xf32> to vector<8x8x4xf32>
    %c0_12 = arith.constant 0 : index
    %c0_13 = arith.constant 0 : index
    %c1_14 = arith.constant 1 : index
    %c0_15 = arith.constant 0 : index
    %c0_16 = arith.constant 0 : index
    %6 = vector.load %arg2[%c0_12, %c0_13, %c1_14, %c0_15, %c0_16] : memref<1x1x10x10x4xf32, #tpu.memory_space<vmem>>, vector<1x1x8x8x4xf32>
    %7 = vector.shape_cast %6 : vector<1x1x8x8x4xf32> to vector<8x8x4xf32>
    %c0_17 = arith.constant 0 : index
    %c0_18 = arith.constant 0 : index
    %c1_19 = arith.constant 1 : index
    %c1_20 = arith.constant 1 : index
    %c0_21 = arith.constant 0 : index
    %8 = vector.load %arg2[%c0_17, %c0_18, %c1_19, %c1_20, %c0_21] : memref<1x1x10x10x4xf32, #tpu.memory_space<vmem>>, vector<1x1x8x8x4xf32>
    %9 = vector.shape_cast %8 : vector<1x1x8x8x4xf32> to vector<8x8x4xf32>
    %c0_22 = arith.constant 0 : index
    %c0_23 = arith.constant 0 : index
    %c1_24 = arith.constant 1 : index
    %c2_25 = arith.constant 2 : index
    %c0_26 = arith.constant 0 : index
    %10 = vector.load %arg2[%c0_22, %c0_23, %c1_24, %c2_25, %c0_26] : memref<1x1x10x10x4xf32, #tpu.memory_space<vmem>>, vector<1x1x8x8x4xf32>
    %11 = vector.shape_cast %10 : vector<1x1x8x8x4xf32> to vector<8x8x4xf32>
    %c0_27 = arith.constant 0 : index
    %c0_28 = arith.constant 0 : index
    %c2_29 = arith.constant 2 : index
    %c0_30 = arith.constant 0 : index
    %c0_31 = arith.constant 0 : index
    %12 = vector.load %arg2[%c0_27, %c0_28, %c2_29, %c0_30, %c0_31] : memref<1x1x10x10x4xf32, #tpu.memory_space<vmem>>, vector<1x1x8x8x4xf32>
    %13 = vector.shape_cast %12 : vector<1x1x8x8x4xf32> to vector<8x8x4xf32>
    %c0_32 = arith.constant 0 : index
    %c0_33 = arith.constant 0 : index
    %c2_34 = arith.constant 2 : index
    %c1_35 = arith.constant 1 : index
    %c0_36 = arith.constant 0 : index
    %14 = vector.load %arg2[%c0_32, %c0_33, %c2_34, %c1_35, %c0_36] : memref<1x1x10x10x4xf32, #tpu.memory_space<vmem>>, vector<1x1x8x8x4xf32>
    %15 = vector.shape_cast %14 : vector<1x1x8x8x4xf32> to vector<8x8x4xf32>
    %c0_37 = arith.constant 0 : index
    %c0_38 = arith.constant 0 : index
    %c2_39 = arith.constant 2 : index
    %c2_40 = arith.constant 2 : index
    %c0_41 = arith.constant 0 : index
    %16 = vector.load %arg2[%c0_37, %c0_38, %c2_39, %c2_40, %c0_41] : memref<1x1x10x10x4xf32, #tpu.memory_space<vmem>>, vector<1x1x8x8x4xf32>
    %17 = vector.shape_cast %16 : vector<1x1x8x8x4xf32> to vector<8x8x4xf32>
    %c0_42 = arith.constant 0 : index
    %c0_43 = arith.constant 0 : index
    %c0_44 = arith.constant 0 : index
    %c0_45 = arith.constant 0 : index
    %c0_46 = arith.constant 0 : index
    %18 = vector.load %arg3[%c0_42, %c0_43, %c0_44, %c0_45, %c0_46] : memref<1x1x10x10x4xf32, #tpu.memory_space<vmem>>, vector<1x1x8x8x4xf32>
    %19 = vector.shape_cast %18 : vector<1x1x8x8x4xf32> to vector<8x8x4xf32>
    %c0_47 = arith.constant 0 : index
    %c0_48 = arith.constant 0 : index
    %c0_49 = arith.constant 0 : index
    %c1_50 = arith.constant 1 : index
    %c0_51 = arith.constant 0 : index
    %20 = vector.load %arg3[%c0_47, %c0_48, %c0_49, %c1_50, %c0_51] : memref<1x1x10x10x4xf32, #tpu.memory_space<vmem>>, vector<1x1x8x8x4xf32>
    %21 = vector.shape_cast %20 : vector<1x1x8x8x4xf32> to vector<8x8x4xf32>
    %c0_52 = arith.constant 0 : index
    %c0_53 = arith.constant 0 : index
    %c0_54 = arith.constant 0 : index
    %c2_55 = arith.constant 2 : index
    %c0_56 = arith.constant 0 : index
    %22 = vector.load %arg3[%c0_52, %c0_53, %c0_54, %c2_55, %c0_56] : memref<1x1x10x10x4xf32, #tpu.memory_space<vmem>>, vector<1x1x8x8x4xf32>
    %23 = vector.shape_cast %22 : vector<1x1x8x8x4xf32> to vector<8x8x4xf32>
    %c0_57 = arith.constant 0 : index
    %c0_58 = arith.constant 0 : index
    %c1_59 = arith.constant 1 : index
    %c0_60 = arith.constant 0 : index
    %c0_61 = arith.constant 0 : index
    %24 = vector.load %arg3[%c0_57, %c0_58, %c1_59, %c0_60, %c0_61] : memref<1x1x10x10x4xf32, #tpu.memory_space<vmem>>, vector<1x1x8x8x4xf32>
    %25 = vector.shape_cast %24 : vector<1x1x8x8x4xf32> to vector<8x8x4xf32>
    %c0_62 = arith.constant 0 : index
    %c0_63 = arith.constant 0 : index
    %c1_64 = arith.constant 1 : index
    %c1_65 = arith.constant 1 : index
    %c0_66 = arith.constant 0 : index
    %26 = vector.load %arg3[%c0_62, %c0_63, %c1_64, %c1_65, %c0_66] : memref<1x1x10x10x4xf32, #tpu.memory_space<vmem>>, vector<1x1x8x8x4xf32>
    %27 = vector.shape_cast %26 : vector<1x1x8x8x4xf32> to vector<8x8x4xf32>
    %c0_67 = arith.constant 0 : index
    %c0_68 = arith.constant 0 : index
    %c1_69 = arith.constant 1 : index
    %c2_70 = arith.constant 2 : index
    %c0_71 = arith.constant 0 : index
    %28 = vector.load %arg3[%c0_67, %c0_68, %c1_69, %c2_70, %c0_71] : memref<1x1x10x10x4xf32, #tpu.memory_space<vmem>>, vector<1x1x8x8x4xf32>
    %29 = vector.shape_cast %28 : vector<1x1x8x8x4xf32> to vector<8x8x4xf32>
    %c0_72 = arith.constant 0 : index
    %c0_73 = arith.constant 0 : index
    %c2_74 = arith.constant 2 : index
    %c0_75 = arith.constant 0 : index
    %c0_76 = arith.constant 0 : index
    %30 = vector.load %arg3[%c0_72, %c0_73, %c2_74, %c0_75, %c0_76] : memref<1x1x10x10x4xf32, #tpu.memory_space<vmem>>, vector<1x1x8x8x4xf32>
    %31 = vector.shape_cast %30 : vector<1x1x8x8x4xf32> to vector<8x8x4xf32>
    %c0_77 = arith.constant 0 : index
    %c0_78 = arith.constant 0 : index
    %c2_79 = arith.constant 2 : index
    %c1_80 = arith.constant 1 : index
    %c0_81 = arith.constant 0 : index
    %32 = vector.load %arg3[%c0_77, %c0_78, %c2_79, %c1_80, %c0_81] : memref<1x1x10x10x4xf32, #tpu.memory_space<vmem>>, vector<1x1x8x8x4xf32>
    %33 = vector.shape_cast %32 : vector<1x1x8x8x4xf32> to vector<8x8x4xf32>
    %c0_82 = arith.constant 0 : index
    %c0_83 = arith.constant 0 : index
    %c2_84 = arith.constant 2 : index
    %c2_85 = arith.constant 2 : index
    %c0_86 = arith.constant 0 : index
    %34 = vector.load %arg3[%c0_82, %c0_83, %c2_84, %c2_85, %c0_86] : memref<1x1x10x10x4xf32, #tpu.memory_space<vmem>>, vector<1x1x8x8x4xf32>
    %35 = vector.shape_cast %34 : vector<1x1x8x8x4xf32> to vector<8x8x4xf32>
    %c0_87 = arith.constant 0 : index
    %c0_88 = arith.constant 0 : index
    %c0_89 = arith.constant 0 : index
    %c0_90 = arith.constant 0 : index
    %c0_91 = arith.constant 0 : index
    %36 = vector.load %arg4[%c0_87, %c0_88, %c0_89, %c0_90, %c0_91] : memref<1x1x10x10x4xf32, #tpu.memory_space<vmem>>, vector<1x1x8x8x4xf32>
    %37 = vector.shape_cast %36 : vector<1x1x8x8x4xf32> to vector<8x8x4xf32>
    %c0_92 = arith.constant 0 : index
    %c0_93 = arith.constant 0 : index
    %c0_94 = arith.constant 0 : index
    %c1_95 = arith.constant 1 : index
    %c0_96 = arith.constant 0 : index
    %38 = vector.load %arg4[%c0_92, %c0_93, %c0_94, %c1_95, %c0_96] : memref<1x1x10x10x4xf32, #tpu.memory_space<vmem>>, vector<1x1x8x8x4xf32>
    %39 = vector.shape_cast %38 : vector<1x1x8x8x4xf32> to vector<8x8x4xf32>
    %c0_97 = arith.constant 0 : index
    %c0_98 = arith.constant 0 : index
    %c0_99 = arith.constant 0 : index
    %c2_100 = arith.constant 2 : index
    %c0_101 = arith.constant 0 : index
    %40 = vector.load %arg4[%c0_97, %c0_98, %c0_99, %c2_100, %c0_101] : memref<1x1x10x10x4xf32, #tpu.memory_space<vmem>>, vector<1x1x8x8x4xf32>
    %41 = vector.shape_cast %40 : vector<1x1x8x8x4xf32> to vector<8x8x4xf32>
    %c0_102 = arith.constant 0 : index
    %c0_103 = arith.constant 0 : index
    %c1_104 = arith.constant 1 : index
    %c0_105 = arith.constant 0 : index
    %c0_106 = arith.constant 0 : index
    %42 = vector.load %arg4[%c0_102, %c0_103, %c1_104, %c0_105, %c0_106] : memref<1x1x10x10x4xf32, #tpu.memory_space<vmem>>, vector<1x1x8x8x4xf32>
    %43 = vector.shape_cast %42 : vector<1x1x8x8x4xf32> to vector<8x8x4xf32>
    %c0_107 = arith.constant 0 : index
    %c0_108 = arith.constant 0 : index
    %c1_109 = arith.constant 1 : index
    %c1_110 = arith.constant 1 : index
    %c0_111 = arith.constant 0 : index
    %44 = vector.load %arg4[%c0_107, %c0_108, %c1_109, %c1_110, %c0_111] : memref<1x1x10x10x4xf32, #tpu.memory_space<vmem>>, vector<1x1x8x8x4xf32>
    %45 = vector.shape_cast %44 : vector<1x1x8x8x4xf32> to vector<8x8x4xf32>
    %c0_112 = arith.constant 0 : index
    %c0_113 = arith.constant 0 : index
    %c1_114 = arith.constant 1 : index
    %c2_115 = arith.constant 2 : index
    %c0_116 = arith.constant 0 : index
    %46 = vector.load %arg4[%c0_112, %c0_113, %c1_114, %c2_115, %c0_116] : memref<1x1x10x10x4xf32, #tpu.memory_space<vmem>>, vector<1x1x8x8x4xf32>
    %47 = vector.shape_cast %46 : vector<1x1x8x8x4xf32> to vector<8x8x4xf32>
    %c0_117 = arith.constant 0 : index
    %c0_118 = arith.constant 0 : index
    %c2_119 = arith.constant 2 : index
    %c0_120 = arith.constant 0 : index
    %c0_121 = arith.constant 0 : index
    %48 = vector.load %arg4[%c0_117, %c0_118, %c2_119, %c0_120, %c0_121] : memref<1x1x10x10x4xf32, #tpu.memory_space<vmem>>, vector<1x1x8x8x4xf32>
    %49 = vector.shape_cast %48 : vector<1x1x8x8x4xf32> to vector<8x8x4xf32>
    %c0_122 = arith.constant 0 : index
    %c0_123 = arith.constant 0 : index
    %c2_124 = arith.constant 2 : index
    %c1_125 = arith.constant 1 : index
    %c0_126 = arith.constant 0 : index
    %50 = vector.load %arg4[%c0_122, %c0_123, %c2_124, %c1_125, %c0_126] : memref<1x1x10x10x4xf32, #tpu.memory_space<vmem>>, vector<1x1x8x8x4xf32>
    %51 = vector.shape_cast %50 : vector<1x1x8x8x4xf32> to vector<8x8x4xf32>
    %c0_127 = arith.constant 0 : index
    %c0_128 = arith.constant 0 : index
    %c2_129 = arith.constant 2 : index
    %c2_130 = arith.constant 2 : index
    %c0_131 = arith.constant 0 : index
    %52 = vector.load %arg4[%c0_127, %c0_128, %c2_129, %c2_130, %c0_131] : memref<1x1x10x10x4xf32, #tpu.memory_space<vmem>>, vector<1x1x8x8x4xf32>
    %53 = vector.shape_cast %52 : vector<1x1x8x8x4xf32> to vector<8x8x4xf32>
    %54 = tpu.concatenate %1, %3, %5, %7, %9, %11, %13, %15, %17, %19, %21, %23, %25, %27, %29, %31 in 2 : vector<8x8x4xf32>, vector<8x8x4xf32>, vector<8x8x4xf32>, vector<8x8x4xf32>, vector<8x8x4xf32>, vector<8x8x4xf32>, vector<8x8x4xf32>, vector<8x8x4xf32>, vector<8x8x4xf32>, vector<8x8x4xf32>, vector<8x8x4xf32>, vector<8x8x4xf32>, vector<8x8x4xf32>, vector<8x8x4xf32>, vector<8x8x4xf32>, vector<8x8x4xf32> -> vector<8x8x64xf32>
    %55 = tpu.concatenate %33, %35, %37, %39, %41, %43, %45, %47, %49, %51, %53 in 2 : vector<8x8x4xf32>, vector<8x8x4xf32>, vector<8x8x4xf32>, vector<8x8x4xf32>, vector<8x8x4xf32>, vector<8x8x4xf32>, vector<8x8x4xf32>, vector<8x8x4xf32>, vector<8x8x4xf32>, vector<8x8x4xf32>, vector<8x8x4xf32> -> vector<8x8x44xf32>
    %56 = tpu.concatenate %54, %55 in 2 : vector<8x8x64xf32>, vector<8x8x44xf32> -> vector<8x8x108xf32>
    %57 = vector.shape_cast %56 : vector<8x8x108xf32> to vector<64x108xf32>
    %c0_132 = arith.constant 0 : index
    %c0_133 = arith.constant 0 : index
    %58 = vector.load %arg5[%c0_132, %c0_133] : memref<108x128xf32, #tpu.memory_space<vmem>>, vector<108x128xf32>
    %cst = arith.constant dense<0.000000e+00> : vector<64x128xf32>
    %59 = tpu.matmul %57, %58, %cst {dimension_numbers = #tpu.dot_dimension_numbers<[1], [0], [0], [1], [0, 0, 1, 1], [], []>} : vector<64x108xf32>, vector<108x128xf32>, vector<64x128xf32> -> vector<64x128xf32>
    %c0_134 = arith.constant 0 : index
    %c0_135 = arith.constant 0 : index
    %60 = vector.load %arg6[%c0_134, %c0_135] : memref<1x128xf32, #tpu.memory_space<vmem>>, vector<1x128xf32>
    %61 = vector.broadcast %60 : vector<1x128xf32> to vector<64x128xf32>
    %62 = arith.mulf %59, %61 : vector<64x128xf32>
    %c0_136 = arith.constant 0 : index
    %c0_137 = arith.constant 0 : index
    %63 = vector.load %arg7[%c0_136, %c0_137] : memref<1x128xf32, #tpu.memory_space<vmem>>, vector<1x128xf32>
    %64 = vector.broadcast %63 : vector<1x128xf32> to vector<64x128xf32>
    %65 = arith.addf %62, %64 : vector<64x128xf32>
    %cst_138 = arith.constant 0.000000e+00 : f32
    %66 = vector.broadcast %cst_138 : f32 to vector<64x128xf32>
    %67 = arith.maximumf %65, %66 : vector<64x128xf32>
    %c0_139 = arith.constant 0 : index
    %c0_140 = arith.constant 0 : index
    %c0_141 = arith.constant 0 : index
    %c0_142 = arith.constant 0 : index
    %68 = vector.load %arg8[%c0_139, %c0_140, %c0_141, %c0_142] : memref<1x1x64x128xf32, #tpu.memory_space<vmem>>, vector<1x1x64x128xf32>
    %69 = vector.shape_cast %68 : vector<1x1x64x128xf32> to vector<64x128xf32>
    %70 = vector.shape_cast %67 : vector<64x128xf32> to vector<1x1x64x128xf32>
    tpu.vector_store %arg8[%c0_139, %c0_140, %c0_141, %c0_142], %70 {strides = array<i32>} : memref<1x1x64x128xf32, #tpu.memory_space<vmem>>, vector<1x1x64x128xf32>,
    return
  }
  func.func @transform_0(%arg0: i32, %arg1: i32) -> (i32, i32, i32, i32, i32) {
    %c0_i32 = arith.constant 0 : i32
    %0 = arith.addi %arg1, %c0_i32 : i32
    %c0_i32_0 = arith.constant 0 : i32
    %c0_i32_1 = arith.constant 0 : i32
    %c0_i32_2 = arith.constant 0 : i32
    %c0_i32_3 = arith.constant 0 : i32
    return %arg0, %0, %c0_i32_0, %c0_i32_1, %c0_i32_2 : i32, i32, i32, i32, i32
  }
  func.func @transform_1(%arg0: i32, %arg1: i32) -> (i32, i32, i32, i32, i32) {
    %c1_i32 = arith.constant 1 : i32
    %0 = arith.addi %arg1, %c1_i32 : i32
    %c0_i32 = arith.constant 0 : i32
    %c0_i32_0 = arith.constant 0 : i32
    %c0_i32_1 = arith.constant 0 : i32
    %c0_i32_2 = arith.constant 0 : i32
    return %arg0, %0, %c0_i32, %c0_i32_0, %c0_i32_1 : i32, i32, i32, i32, i32
  }
  func.func @transform_2(%arg0: i32, %arg1: i32) -> (i32, i32, i32, i32, i32) {
    %c2_i32 = arith.constant 2 : i32
    %0 = arith.addi %arg1, %c2_i32 : i32
    %c0_i32 = arith.constant 0 : i32
    %c0_i32_0 = arith.constant 0 : i32
    %c0_i32_1 = arith.constant 0 : i32
    %c0_i32_2 = arith.constant 0 : i32
    return %arg0, %0, %c0_i32, %c0_i32_0, %c0_i32_1 : i32, i32, i32, i32, i32
  }
  func.func @transform_3(%arg0: i32, %arg1: i32) -> (i32, i32) {
    %c0_i32 = arith.constant 0 : i32
    %c0_i32_0 = arith.constant 0 : i32
    %c0_i32_1 = arith.constant 0 : i32
    return %c0_i32, %c0_i32_0 : i32, i32
  }
  func.func @transform_4(%arg0: i32, %arg1: i32) -> (i32, i32) {
    %c0_i32 = arith.constant 0 : i32
    %c0_i32_0 = arith.constant 0 : i32
    %c0_i32_1 = arith.constant 0 : i32
    return %c0_i32, %c0_i32_0 : i32, i32
  }
  func.func @transform_5(%arg0: i32, %arg1: i32) -> (i32, i32) {
    %c0_i32 = arith.constant 0 : i32
    %c0_i32_0 = arith.constant 0 : i32
    %c0_i32_1 = arith.constant 0 : i32
    return %c0_i32, %c0_i32_0 : i32, i32
  }
  func.func @transform_6(%arg0: i32, %arg1: i32) -> (i32, i32, i32, i32) {
    %c0_i32 = arith.constant 0 : i32
    %c0_i32_0 = arith.constant 0 : i32
    %c0_i32_1 = arith.constant 0 : i32
    return %arg0, %arg1, %c0_i32, %c0_i32_0 : i32, i32, i32, i32
  }
}

</mosaic_0001>

<llo_original>
// kernel: tpu_custom_call.1
$region0: #{tpu_custom_call.1}
  #allocation0 [shape = 'u32[]', space=smem, size = 0x4, offset = 0x4, fixed_abs, tag = 'smem constant byte address 0x4 - core index']
  #allocation1 [shape = 'u32[144,128]{1,0:T(1,128)}', space=vmem, size = 0x12000, scoped, tag = 'internal scratch']
  %s0 = inlined_call_operand.vmem [shape: f32[2,10,10,10,4], index: 0, kind: input, shape index: {}]
  %s1 = inlined_call_operand.vmem [shape: f32[2,10,10,10,4], index: 1, kind: input, shape index: {}]
  %s2 = inlined_call_operand.vmem [shape: f32[2,10,10,10,4], index: 2, kind: input, shape index: {}]
  %s3 = inlined_call_operand.vmem [shape: f32[108,128], index: 3, kind: input, shape index: {}]
  %s4 = inlined_call_operand.vmem [shape: f32[1,128], index: 4, kind: input, shape index: {}]
  %s5 = inlined_call_operand.vmem [shape: f32[1,128], index: 5, kind: input, shape index: {}]
  %s6 = inlined_call_operand.hbm [shape: f32[2,8,64,128], index: 6, kind: output, shape index: {}]
  %s7 = sld [smem:[#allocation0]]
  $region57: #{tpu_custom_call.1} parent=0
    _
  %s9 = ssub.s32 1, %s7
  %s10 = scalar_select 0, %s9, %s7
  $region1: #{tpu_custom_call.1} parent=0
    #allocation2 [shape = 'u8[65536]{0}', space=vmem, size = 0x10000, scoped, tag = 'output window, operand 0']
    #allocation3 [shape = 's32[2]{0}', space=sflag, size = 0x8, scoped, tag = 'scoped memory for tpu_custom_call.1']
    %11 = vsyncpa [#allocation3], 0
    %s12 = scalar_lea.sflag [#allocation3], 1
    %13 = vsyncpa %s12, 0
    loop: start=0, step=1, limit=18
    $region2: #{tpu_custom_call.1} parent=1 // loop_pre_header
      _
    $region3: #{tpu_custom_call.1} parent=1 // loop_header
      %s15 = sphi 0, %s19
      %p16 = scmp.ge.s32.totalorder %s15, 18
      %s22 = sphi 0, %s34
      %s23 = sphi 0, %s30
      %s24 = sphi 0, %s22
      %s25 = sphi 0, %s23
      %s26 = sphi 0, %s24
      %s27 = sphi 0, %s25
      %s39 = sphi 0, %s41
      %s42 = sphi 0, %s39
      %s43 = sphi 0, %s42
      %s59 = sphi 0, %s43
      %s69 = sphi 0, %s71
      %s72 = sphi 0, %s69
      %s73 = sphi 0, %s72
      %s89 = sphi 0, %s73
      %s99 = sphi 0, %s101
      %s102 = sphi 0, %s99
      %s103 = sphi 0, %s102
      %s119 = sphi 0, %s103
      %s123 = sphi 0, %s123
      %s125 = sphi 0, %s123
      %s126 = sphi 0, %s125
      %s140 = sphi 0, %s126
      %s144 = sphi 0, %s144
      %s146 = sphi 0, %s144
      %s147 = sphi 0, %s146
      %s161 = sphi 0, %s147
      %s165 = sphi 0, %s165
      %s167 = sphi 0, %s165
      %s168 = sphi 0, %s167
      %s182 = sphi 0, %s168
      %s190 = sphi 0, %s192
      %s193 = sphi 0, %s190
      %s194 = sphi 0, %s193
      %s210 = sphi 0, %s194
    $region4: #{tpu_custom_call.1} parent=1 // loop_header_branch
      %18 = sbr.rel (%p16) target = $region8
    $region5: #{tpu_custom_call.1} parent=1 // loop_body
      %s20 = ssub.s32 %s15, 1
      %s21 = ssub.s32 %s15, 2
      %s28 = sadd.s32 1, %s23
      %p29 = scmp.ge.s32.totalorder %s28, 8
      %s30 = scalar_select %p29, 0, %s28
      %s31 = sadd.s32 1, %s22
      %s32 = scalar_select %p29, %s31, %s22
      %p33 = scmp.ge.s32.totalorder %s32, 2
      %s34 = scalar_select %p33, 0, %s32
      %s35 = ssub.s32 %s22, %s34
      %s36 = ssub.s32 %s23, %s30
      %s37 = sor.u32 %s35, %s36
      %p38 = scmp.eq.s32.totalorder %s37, 0
      %s40 = sadd.s32 %s39, 1
      %s41 = scalar_select %p38, %s39, %s40
      %p44 = pneg %p38
      %p45 = scmp.eq.s32.totalorder %s15, 15
      %p46 = por %p44, %p45
      %p47 = scmp.ne.s32.totalorder %s39, %s42
      %p48 = scmp.eq.s32.totalorder %s15, 0
      %p49 = por %p47, %p48
      %p50 = scmp.ne.s32.totalorder %s39, %s42
      %p51 = scmp.eq.s32.totalorder %s20, 15
      %p52 = por %p50, %p51
      %p53 = scmp.ne.s32.totalorder %s42, %s43
      %p54 = scmp.eq.s32.totalorder %s20, 0
      %p55 = por %p53, %p54
      %p56 = scmp.ne.s32.totalorder %s42, %s43
      %p57 = scmp.eq.s32.totalorder %s21, 15
      %p58 = por %p56, %p57
      %p60 = scmp.ne.s32.totalorder %s43, %s59
      %p61 = scmp.eq.s32.totalorder %s21, 0
      %p62 = por %p60, %p61
      %s63 = sadd.s32 %s23, 1
      %s64 = sadd.s32 %s30, 1
      %s65 = ssub.s32 %s22, %s34
      %s66 = ssub.s32 %s63, %s64
      %s67 = sor.u32 %s65, %s66
      %p68 = scmp.eq.s32.totalorder %s67, 0
      %s70 = sadd.s32 %s69, 1
      %s71 = scalar_select %p68, %s69, %s70
      %p74 = pneg %p68
      %p75 = scmp.eq.s32.totalorder %s15, 15
      %p76 = por %p74, %p75
      %p77 = scmp.ne.s32.totalorder %s69, %s72
      %p78 = scmp.eq.s32.totalorder %s15, 0
      %p79 = por %p77, %p78
      %p80 = scmp.ne.s32.totalorder %s69, %s72
      %p81 = scmp.eq.s32.totalorder %s20, 15
      %p82 = por %p80, %p81
      %p83 = scmp.ne.s32.totalorder %s72, %s73
      %p84 = scmp.eq.s32.totalorder %s20, 0
      %p85 = por %p83, %p84
      %p86 = scmp.ne.s32.totalorder %s72, %s73
      %p87 = scmp.eq.s32.totalorder %s21, 15
      %p88 = por %p86, %p87
      %p90 = scmp.ne.s32.totalorder %s73, %s89
      %p91 = scmp.eq.s32.totalorder %s21, 0
      %p92 = por %p90, %p91
      %s93 = sadd.s32 %s23, 2
      %s94 = sadd.s32 %s30, 2
      %s95 = ssub.s32 %s22, %s34
      %s96 = ssub.s32 %s93, %s94
      %s97 = sor.u32 %s95, %s96
      %p98 = scmp.eq.s32.totalorder %s97, 0
      %s100 = sadd.s32 %s99, 1
      %s101 = scalar_select %p98, %s99, %s100
      %p104 = pneg %p98
      %p105 = scmp.eq.s32.totalorder %s15, 15
      %p106 = por %p104, %p105
      %p107 = scmp.ne.s32.totalorder %s99, %s102
      %p108 = scmp.eq.s32.totalorder %s15, 0
      %p109 = por %p107, %p108
      %p110 = scmp.ne.s32.totalorder %s99, %s102
      %p111 = scmp.eq.s32.totalorder %s20, 15
      %p112 = por %p110, %p111
      %p113 = scmp.ne.s32.totalorder %s102, %s103
      %p114 = scmp.eq.s32.totalorder %s20, 0
      %p115 = por %p113, %p114
      %p116 = scmp.ne.s32.totalorder %s102, %s103
      %p117 = scmp.eq.s32.totalorder %s21, 15
      %p118 = por %p116, %p117
      %p120 = scmp.ne.s32.totalorder %s103, %s119
      %p121 = scmp.eq.s32.totalorder %s21, 0
      %p122 = por %p120, %p121
      %s124 = sadd.s32 %s123, 1
      %p127 = scmp.eq.s32.totalorder %s15, 15
      %p128 = scmp.ne.s32.totalorder %s123, %s125
      %p129 = scmp.eq.s32.totalorder %s15, 0
      %p130 = por %p128, %p129
      %p131 = scmp.ne.s32.totalorder %s123, %s125
      %p132 = scmp.eq.s32.totalorder %s20, 15
      %p133 = por %p131, %p132
      %p134 = scmp.ne.s32.totalorder %s125, %s126
      %p135 = scmp.eq.s32.totalorder %s20, 0
      %p136 = por %p134, %p135
      %p137 = scmp.ne.s32.totalorder %s125, %s126
      %p138 = scmp.eq.s32.totalorder %s21, 15
      %p139 = por %p137, %p138
      %p141 = scmp.ne.s32.totalorder %s126, %s140
      %p142 = scmp.eq.s32.totalorder %s21, 0
      %p143 = por %p141, %p142
      %s145 = sadd.s32 %s144, 1
      %p148 = scmp.eq.s32.totalorder %s15, 15
      %p149 = scmp.ne.s32.totalorder %s144, %s146
      %p150 = scmp.eq.s32.totalorder %s15, 0
      %p151 = por %p149, %p150
      %p152 = scmp.ne.s32.totalorder %s144, %s146
      %p153 = scmp.eq.s32.totalorder %s20, 15
      %p154 = por %p152, %p153
      %p155 = scmp.ne.s32.totalorder %s146, %s147
      %p156 = scmp.eq.s32.totalorder %s20, 0
      %p157 = por %p155, %p156
      %p158 = scmp.ne.s32.totalorder %s146, %s147
      %p159 = scmp.eq.s32.totalorder %s21, 15
      %p160 = por %p158, %p159
      %p162 = scmp.ne.s32.totalorder %s147, %s161
      %p163 = scmp.eq.s32.totalorder %s21, 0
      %p164 = por %p162, %p163
      %s166 = sadd.s32 %s165, 1
      %p169 = scmp.eq.s32.totalorder %s15, 15
      %p170 = scmp.ne.s32.totalorder %s165, %s167
      %p171 = scmp.eq.s32.totalorder %s15, 0
      %p172 = por %p170, %p171
      %p173 = scmp.ne.s32.totalorder %s165, %s167
      %p174 = scmp.eq.s32.totalorder %s20, 15
      %p175 = por %p173, %p174
      %p176 = scmp.ne.s32.totalorder %s167, %s168
      %p177 = scmp.eq.s32.totalorder %s20, 0
      %p178 = por %p176, %p177
      %p179 = scmp.ne.s32.totalorder %s167, %s168
      %p180 = scmp.eq.s32.totalorder %s21, 15
      %p181 = por %p179, %p180
      %p183 = scmp.ne.s32.totalorder %s168, %s182
      %p184 = scmp.eq.s32.totalorder %s21, 0
      %p185 = por %p183, %p184
      %s186 = ssub.s32 %s22, %s34
      %s187 = ssub.s32 %s23, %s30
      %s188 = sor.u32 %s186, %s187
      %p189 = scmp.eq.s32.totalorder %s188, 0
      %s191 = sadd.s32 %s190, 1
      %s192 = scalar_select %p189, %s190, %s191
      %p195 = pneg %p189
      %p196 = scmp.eq.s32.totalorder %s15, 15
      %p197 = por %p195, %p196
      %p198 = scmp.ne.s32.totalorder %s190, %s193
      %p199 = scmp.eq.s32.totalorder %s15, 0
      %p200 = por %p198, %p199
      %p201 = scmp.ne.s32.totalorder %s190, %s193
      %p202 = scmp.eq.s32.totalorder %s20, 15
      %p203 = por %p201, %p202
      %p204 = scmp.ne.s32.totalorder %s193, %s194
      %p205 = scmp.eq.s32.totalorder %s20, 0
      %p206 = por %p204, %p205
      %p207 = scmp.ne.s32.totalorder %s193, %s194
      %p208 = scmp.eq.s32.totalorder %s21, 15
      %p209 = por %p207, %p208
      %p211 = scmp.ne.s32.totalorder %s194, %s210
      %p212 = scmp.eq.s32.totalorder %s21, 0
      %p213 = por %p211, %p212
      %p214 = scmp.le.s32.totalorder 1, %s15
      %p215 = scmp.lt.s32.totalorder %s15, 17
      %p216 = pnand %p214, %p215
      %p217 = pneg %p216
      // Predicated region
      $region9: #{tpu_custom_call.1} parent=5 // pred_check
        _
      $region10: #{tpu_custom_call.1} parent=5 // pred_check_branch
        %219 = sbr.rel (%p216) target = $region12
      $region11: #{tpu_custom_call.1} parent=5 // pred_region
        %s220 = ssub.s32 %s15, 1
        // Predicated region
        $region13: #{tpu_custom_call.1} parent=11 // pred_check
          %p221 = pneg %p136
        $region14: #{tpu_custom_call.1} parent=11 // pred_check_branch
          %223 = sbr.rel (%p221) target = $region16
        $region15: #{tpu_custom_call.1} parent=11 // pred_region
          _
        $region16: #{tpu_custom_call.1} parent=11 // pred_fallthru
          _
        // Predicated region
        $region17: #{tpu_custom_call.1} parent=11 // pred_check
          %p224 = pneg %p157
        $region18: #{tpu_custom_call.1} parent=11 // pred_check_branch
          %226 = sbr.rel (%p224) target = $region20
        $region19: #{tpu_custom_call.1} parent=11 // pred_region
          _
        $region20: #{tpu_custom_call.1} parent=11 // pred_fallthru
          _
        // Predicated region
        $region21: #{tpu_custom_call.1} parent=11 // pred_check
          %p227 = pneg %p178
        $region22: #{tpu_custom_call.1} parent=11 // pred_check_branch
          %229 = sbr.rel (%p227) target = $region24
        $region23: #{tpu_custom_call.1} parent=11 // pred_region
          _
        $region24: #{tpu_custom_call.1} parent=11 // pred_fallthru
          _
      $region12: #{tpu_custom_call.1} parent=5 // pred_fallthru
        _
      %p230 = scmp.lt.s32.totalorder %s15, 16
      // Predicated region
      $region25: #{tpu_custom_call.1} parent=5 // pred_check
        %p231 = pneg %p230
      $region26: #{tpu_custom_call.1} parent=5 // pred_check_branch
        %233 = sbr.rel (%p231) target = $region28
      $region27: #{tpu_custom_call.1} parent=5 // pred_region
        // Predicated region
        $region29: #{tpu_custom_call.1} parent=27 // pred_check
          %p234 = pneg %p49
        $region30: #{tpu_custom_call.1} parent=27 // pred_check_branch
          %236 = sbr.rel (%p234) target = $region32
        $region31: #{tpu_custom_call.1} parent=27 // pred_region
          %p237 = scmp.lt.s32.totalorder %s22, 1
          %s238 = scalar_select %p237, %s22, 1
          %p239 = scmp.lt.s32.totalorder %s23, 9
          %s240 = scalar_select %p239, %s23, 9
          %s241 = smul.addr %s240, 20
          %s242 = smul.addr %s238, 200
          %s243 = sadd.s32 %s241, %s242
          %s244 = smul.addr %s243, 8
          %s245 = scalar_lea.vmem %s0, %s244
        $region32: #{tpu_custom_call.1} parent=27 // pred_fallthru
          _
        // Predicated region
        $region33: #{tpu_custom_call.1} parent=27 // pred_check
          %p246 = pneg %p79
        $region34: #{tpu_custom_call.1} parent=27 // pred_check_branch
          %248 = sbr.rel (%p246) target = $region36
        $region35: #{tpu_custom_call.1} parent=27 // pred_region
          %s249 = sadd.s32 %s23, 1
          %p250 = scmp.lt.s32.totalorder %s22, 1
          %s251 = scalar_select %p250, %s22, 1
          %p252 = scmp.lt.s32.totalorder %s249, 9
          %s253 = scalar_select %p252, %s249, 9
          %s254 = smul.addr %s253, 20
          %s255 = smul.addr %s251, 200
          %s256 = sadd.s32 %s254, %s255
          %s257 = smul.addr %s256, 8
          %s258 = scalar_lea.vmem %s1, %s257
          %s259 = sadd.s32 %s23, 1
        $region36: #{tpu_custom_call.1} parent=27 // pred_fallthru
          _
        // Predicated region
        $region37: #{tpu_custom_call.1} parent=27 // pred_check
          %p260 = pneg %p109
        $region38: #{tpu_custom_call.1} parent=27 // pred_check_branch
          %262 = sbr.rel (%p260) target = $region40
        $region39: #{tpu_custom_call.1} parent=27 // pred_region
          %s263 = sadd.s32 %s23, 2
          %p264 = scmp.lt.s32.totalorder %s22, 1
          %s265 = scalar_select %p264, %s22, 1
          %p266 = scmp.lt.s32.totalorder %s263, 9
          %s267 = scalar_select %p266, %s263, 9
          %s268 = smul.addr %s267, 20
          %s269 = smul.addr %s265, 200
          %s270 = sadd.s32 %s268, %s269
          %s271 = smul.addr %s270, 8
          %s272 = scalar_lea.vmem %s2, %s271
          %s273 = sadd.s32 %s23, 2
        $region40: #{tpu_custom_call.1} parent=27 // pred_fallthru
          _
      $region28: #{tpu_custom_call.1} parent=5 // pred_fallthru
        _
      %p274 = scmp.le.s32.totalorder 1, %s15
      %p275 = scmp.lt.s32.totalorder %s15, 17
      %p276 = pnand %p274, %p275
      %p277 = pneg %p276
      // Predicated region
      $region41: #{tpu_custom_call.1} parent=5 // pred_check
        _
      $region42: #{tpu_custom_call.1} parent=5 // pred_check_branch
        %279 = sbr.rel (%p276) target = $region44
      $region43: #{tpu_custom_call.1} parent=5 // pred_region
        %s280 = ssub.s32 %s15, 1
        %p281 = scmp.lt.s32.totalorder %s24, 1
        %s282 = scalar_select %p281, %s24, 1
        %p283 = scmp.lt.s32.totalorder %s25, 9
        %s284 = scalar_select %p283, %s25, 9
        %s285 = smul.addr %s284, 20
        %s286 = smul.addr %s282, 200
        %s287 = sadd.s32 %s285, %s286
        %s288 = smul.addr %s287, 8
        %s289 = scalar_lea.vmem %s0, %s288
        %p290 = pneg %p55
        %p291 = pneg %p52
        %s292 = sadd.s32 %s25, 1
        %p293 = scmp.lt.s32.totalorder %s24, 1
        %s294 = scalar_select %p293, %s24, 1
        %p295 = scmp.lt.s32.totalorder %s292, 9
        %s296 = scalar_select %p295, %s292, 9
        %s297 = smul.addr %s296, 20
        %s298 = smul.addr %s294, 200
        %s299 = sadd.s32 %s297, %s298
        %s300 = smul.addr %s299, 8
        %s301 = scalar_lea.vmem %s1, %s300
        %p302 = pneg %p85
        %p303 = pneg %p82
        %s304 = sadd.s32 %s25, 2
        %p305 = scmp.lt.s32.totalorder %s24, 1
        %s306 = scalar_select %p305, %s24, 1
        %p307 = scmp.lt.s32.totalorder %s304, 9
        %s308 = scalar_select %p307, %s304, 9
        %s309 = smul.addr %s308, 20
        %s310 = smul.addr %s306, 200
        %s311 = sadd.s32 %s309, %s310
        %s312 = smul.addr %s311, 8
        %s313 = scalar_lea.vmem %s2, %s312
        %p314 = pneg %p115
        %p315 = pneg %p112
        %p316 = pneg %p136
        %p317 = pneg %p133
        %p318 = pneg %p157
        %p319 = pneg %p154
        %p320 = pneg %p178
        %p321 = pneg %p175
        %p322 = pneg %p206
        %p323 = pneg %p203
        %s324 = sand.u32 %s193, 1
        %s325 = scalar_lea.sflag [#allocation3], %s324
        %s326 = sand.u32 %s193, 1
        %s327 = smul.addr %s326, 64
        %s328 = scalar_lea.vmem [#allocation2], %s327
        %p329 = scmp.lt.s32.totalorder %s24, 1
        %s330 = scalar_select %p329, %s24, 1
        %p331 = scmp.lt.s32.totalorder %s25, 9
        %s332 = scalar_select %p331, %s25, 9
        %s333 = smul.addr %s332, 20
        %s334 = smul.addr %s330, 200
        %s335 = sadd.s32 %s333, %s334
        %s336 = smul.addr %s335, 8
        %s337 = scalar_lea.vmem %s0, %s336
        %s338 = sadd.s32 %s25, 1
        %p339 = scmp.lt.s32.totalorder %s24, 1
        %s340 = scalar_select %p339, %s24, 1
        %p341 = scmp.lt.s32.totalorder %s338, 9
        %s342 = scalar_select %p341, %s338, 9
        %s343 = smul.addr %s342, 20
        %s344 = smul.addr %s340, 200
        %s345 = sadd.s32 %s343, %s344
        %s346 = smul.addr %s345, 8
        %s347 = scalar_lea.vmem %s1, %s346
        %s348 = sadd.s32 %s25, 1
        %s349 = sadd.s32 %s25, 2
        %p350 = scmp.lt.s32.totalorder %s24, 1
        %s351 = scalar_select %p350, %s24, 1
        %p352 = scmp.lt.s32.totalorder %s349, 9
        %s353 = scalar_select %p352, %s349, 9
        %s354 = smul.addr %s353, 20
        %s355 = smul.addr %s351, 200
        %s356 = sadd.s32 %s354, %s355
        %s357 = smul.addr %s356, 8
        %s358 = scalar_lea.vmem %s2, %s357
        %s359 = sadd.s32 %s25, 2
        %v360 = vld [vmem:[%s337] sm:$0xff]
        %v361 = vld [vmem:[%s337 + $0x10] sm:$0xff]
        %v362 = vld [vmem:[%s337 + $0x20] sm:$0xff]
        %v363 = vld [vmem:[%s337 + $0x30] sm:$0xff]
        %v364 = vld [vmem:[%s337 + $0x40] sm:$0xff]
        %v365 = vld [vmem:[%s337 + $0x50] sm:$0xff]
        %v366 = vld [vmem:[%s337 + $0x60] sm:$0xff]
        %v367 = vld [vmem:[%s337 + $0x70] sm:$0xff]
        %v368 = vld [vmem:[%s337 + $0x1] sm:$0xff]
        %v369 = vld [vmem:[%s337 + $0x11] sm:$0xff]
        %v370 = vld [vmem:[%s337 + $0x21] sm:$0xff]
        %v371 = vld [vmem:[%s337 + $0x31] sm:$0xff]
        %v372 = vld [vmem:[%s337 + $0x41] sm:$0xff]
        %v373 = vld [vmem:[%s337 + $0x51] sm:$0xff]
        %v374 = vld [vmem:[%s337 + $0x61] sm:$0xff]
        %v375 = vld [vmem:[%s337 + $0x71] sm:$0xff]
        %v376 = vld [vmem:[%s337 + $0x2] sm:$0xff]
        %v377 = vld [vmem:[%s337 + $0x12] sm:$0xff]
        %v378 = vld [vmem:[%s337 + $0x22] sm:$0xff]
        %v379 = vld [vmem:[%s337 + $0x32] sm:$0xff]
        %v380 = vld [vmem:[%s337 + $0x42] sm:$0xff]
        %v381 = vld [vmem:[%s337 + $0x52] sm:$0xff]
        %v382 = vld [vmem:[%s337 + $0x62] sm:$0xff]
        %v383 = vld [vmem:[%s337 + $0x72] sm:$0xff]
        %s384 = scalar_lea.vmem %s337, 16
        %v385 = vld [vmem:[%s384] sm:$0xff]
        %v386 = vld [vmem:[%s384 + $0x10] sm:$0xff]
        %v387 = vld [vmem:[%s384 + $0x20] sm:$0xff]
        %v388 = vld [vmem:[%s384 + $0x30] sm:$0xff]
        %v389 = vld [vmem:[%s384 + $0x40] sm:$0xff]
        %v390 = vld [vmem:[%s384 + $0x50] sm:$0xff]
        %v391 = vld [vmem:[%s384 + $0x60] sm:$0xff]
        %v392 = vld [vmem:[%s384 + $0x70] sm:$0xff]
        %v393 = vld [vmem:[%s384 + $0x1] sm:$0xff]
        %v394 = vld [vmem:[%s384 + $0x11] sm:$0xff]
        %v395 = vld [vmem:[%s384 + $0x21] sm:$0xff]
        %v396 = vld [vmem:[%s384 + $0x31] sm:$0xff]
        %v397 = vld [vmem:[%s384 + $0x41] sm:$0xff]
        %v398 = vld [vmem:[%s384 + $0x51] sm:$0xff]
        %v399 = vld [vmem:[%s384 + $0x61] sm:$0xff]
        %v400 = vld [vmem:[%s384 + $0x71] sm:$0xff]
        %v401 = vld [vmem:[%s384 + $0x2] sm:$0xff]
        %v402 = vld [vmem:[%s384 + $0x12] sm:$0xff]
        %v403 = vld [vmem:[%s384 + $0x22] sm:$0xff]
        %v404 = vld [vmem:[%s384 + $0x32] sm:$0xff]
        %v405 = vld [vmem:[%s384 + $0x42] sm:$0xff]
        %v406 = vld [vmem:[%s384 + $0x52] sm:$0xff]
        %v407 = vld [vmem:[%s384 + $0x62] sm:$0xff]
        %v408 = vld [vmem:[%s384 + $0x72] sm:$0xff]
        %s409 = scalar_lea.vmem %s337, 32
        %v410 = vld [vmem:[%s409] sm:$0xff]
        %v411 = vld [vmem:[%s409 + $0x10] sm:$0xff]
        %v412 = vld [vmem:[%s409 + $0x20] sm:$0xff]
        %v413 = vld [vmem:[%s409 + $0x30] sm:$0xff]
        %v414 = vld [vmem:[%s409 + $0x40] sm:$0xff]
        %v415 = vld [vmem:[%s409 + $0x50] sm:$0xff]
        %v416 = vld [vmem:[%s409 + $0x60] sm:$0xff]
        %v417 = vld [vmem:[%s409 + $0x70] sm:$0xff]
        %v418 = vld [vmem:[%s409 + $0x1] sm:$0xff]
        %v419 = vld [vmem:[%s409 + $0x11] sm:$0xff]
        %v420 = vld [vmem:[%s409 + $0x21] sm:$0xff]
        %v421 = vld [vmem:[%s409 + $0x31] sm:$0xff]
        %v422 = vld [vmem:[%s409 + $0x41] sm:$0xff]
        %v423 = vld [vmem:[%s409 + $0x51] sm:$0xff]
        %v424 = vld [vmem:[%s409 + $0x61] sm:$0xff]
        %v425 = vld [vmem:[%s409 + $0x71] sm:$0xff]
        %v426 = vld [vmem:[%s409 + $0x2] sm:$0xff]
        %v427 = vld [vmem:[%s409 + $0x12] sm:$0xff]
        %v428 = vld [vmem:[%s409 + $0x22] sm:$0xff]
        %v429 = vld [vmem:[%s409 + $0x32] sm:$0xff]
        %v430 = vld [vmem:[%s409 + $0x42] sm:$0xff]
        %v431 = vld [vmem:[%s409 + $0x52] sm:$0xff]
        %v432 = vld [vmem:[%s409 + $0x62] sm:$0xff]
        %v433 = vld [vmem:[%s409 + $0x72] sm:$0xff]
        %v434 = vld [vmem:[%s347] sm:$0xff]
        %v435 = vld [vmem:[%s347 + $0x10] sm:$0xff]
        %v436 = vld [vmem:[%s347 + $0x20] sm:$0xff]
        %v437 = vld [vmem:[%s347 + $0x30] sm:$0xff]
        %v438 = vld [vmem:[%s347 + $0x40] sm:$0xff]
        %v439 = vld [vmem:[%s347 + $0x50] sm:$0xff]
        %v440 = vld [vmem:[%s347 + $0x60] sm:$0xff]
        %v441 = vld [vmem:[%s347 + $0x70] sm:$0xff]
        %v442 = vld [vmem:[%s347 + $0x1] sm:$0xff]
        %v443 = vld [vmem:[%s347 + $0x11] sm:$0xff]
        %v444 = vld [vmem:[%s347 + $0x21] sm:$0xff]
        %v445 = vld [vmem:[%s347 + $0x31] sm:$0xff]
        %v446 = vld [vmem:[%s347 + $0x41] sm:$0xff]
        %v447 = vld [vmem:[%s347 + $0x51] sm:$0xff]
        %v448 = vld [vmem:[%s347 + $0x61] sm:$0xff]
        %v449 = vld [vmem:[%s347 + $0x71] sm:$0xff]
        %v450 = vld [vmem:[%s347 + $0x2] sm:$0xff]
        %v451 = vld [vmem:[%s347 + $0x12] sm:$0xff]
        %v452 = vld [vmem:[%s347 + $0x22] sm:$0xff]
        %v453 = vld [vmem:[%s347 + $0x32] sm:$0xff]
        %v454 = vld [vmem:[%s347 + $0x42] sm:$0xff]
        %v455 = vld [vmem:[%s347 + $0x52] sm:$0xff]
        %v456 = vld [vmem:[%s347 + $0x62] sm:$0xff]
        %v457 = vld [vmem:[%s347 + $0x72] sm:$0xff]
        %s458 = scalar_lea.vmem %s347, 16
        %v459 = vld [vmem:[%s458] sm:$0xff]
        %v460 = vld [vmem:[%s458 + $0x10] sm:$0xff]
        %v461 = vld [vmem:[%s458 + $0x20] sm:$0xff]
        %v462 = vld [vmem:[%s458 + $0x30] sm:$0xff]
        %v463 = vld [vmem:[%s458 + $0x40] sm:$0xff]
        %v464 = vld [vmem:[%s458 + $0x50] sm:$0xff]
        %v465 = vld [vmem:[%s458 + $0x60] sm:$0xff]
        %v466 = vld [vmem:[%s458 + $0x70] sm:$0xff]
        %v467 = vld [vmem:[%s458 + $0x1] sm:$0xff]
        %v468 = vld [vmem:[%s458 + $0x11] sm:$0xff]
        %v469 = vld [vmem:[%s458 + $0x21] sm:$0xff]
        %v470 = vld [vmem:[%s458 + $0x31] sm:$0xff]
        %v471 = vld [vmem:[%s458 + $0x41] sm:$0xff]
        %v472 = vld [vmem:[%s458 + $0x51] sm:$0xff]
        %v473 = vld [vmem:[%s458 + $0x61] sm:$0xff]
        %v474 = vld [vmem:[%s458 + $0x71] sm:$0xff]
        %v475 = vld [vmem:[%s458 + $0x2] sm:$0xff]
        %v476 = vld [vmem:[%s458 + $0x12] sm:$0xff]
        %v477 = vld [vmem:[%s458 + $0x22] sm:$0xff]
        %v478 = vld [vmem:[%s458 + $0x32] sm:$0xff]
        %v479 = vld [vmem:[%s458 + $0x42] sm:$0xff]
        %v480 = vld [vmem:[%s458 + $0x52] sm:$0xff]
        %v481 = vld [vmem:[%s458 + $0x62] sm:$0xff]
        %v482 = vld [vmem:[%s458 + $0x72] sm:$0xff]
        %s483 = scalar_lea.vmem %s347, 32
        %v484 = vld [vmem:[%s483] sm:$0xff]
        %v485 = vld [vmem:[%s483 + $0x10] sm:$0xff]
        %v486 = vld [vmem:[%s483 + $0x20] sm:$0xff]
        %v487 = vld [vmem:[%s483 + $0x30] sm:$0xff]
        %v488 = vld [vmem:[%s483 + $0x40] sm:$0xff]
        %v489 = vld [vmem:[%s483 + $0x50] sm:$0xff]
        %v490 = vld [vmem:[%s483 + $0x60] sm:$0xff]
        %v491 = vld [vmem:[%s483 + $0x70] sm:$0xff]
        %v492 = vld [vmem:[%s483 + $0x1] sm:$0xff]
        %v493 = vld [vmem:[%s483 + $0x11] sm:$0xff]
        %v494 = vld [vmem:[%s483 + $0x21] sm:$0xff]
        %v495 = vld [vmem:[%s483 + $0x31] sm:$0xff]
        %v496 = vld [vmem:[%s483 + $0x41] sm:$0xff]
        %v497 = vld [vmem:[%s483 + $0x51] sm:$0xff]
        %v498 = vld [vmem:[%s483 + $0x61] sm:$0xff]
        %v499 = vld [vmem:[%s483 + $0x71] sm:$0xff]
        %v500 = vld [vmem:[%s483 + $0x2] sm:$0xff]
        %v501 = vld [vmem:[%s483 + $0x12] sm:$0xff]
        %v502 = vld [vmem:[%s483 + $0x22] sm:$0xff]
        %v503 = vld [vmem:[%s483 + $0x32] sm:$0xff]
        %v504 = vld [vmem:[%s483 + $0x42] sm:$0xff]
        %v505 = vld [vmem:[%s483 + $0x52] sm:$0xff]
        %v506 = vld [vmem:[%s483 + $0x62] sm:$0xff]
        %v507 = vld [vmem:[%s483 + $0x72] sm:$0xff]
        %v508 = vld [vmem:[%s358] sm:$0xff]
        %v509 = vld [vmem:[%s358 + $0x10] sm:$0xff]
        %v510 = vld [vmem:[%s358 + $0x20] sm:$0xff]
        %v511 = vld [vmem:[%s358 + $0x30] sm:$0xff]
        %v512 = vld [vmem:[%s358 + $0x40] sm:$0xff]
        %v513 = vld [vmem:[%s358 + $0x50] sm:$0xff]
        %v514 = vld [vmem:[%s358 + $0x60] sm:$0xff]
        %v515 = vld [vmem:[%s358 + $0x70] sm:$0xff]
        %v516 = vld [vmem:[%s358 + $0x1] sm:$0xff]
        %v517 = vld [vmem:[%s358 + $0x11] sm:$0xff]
        %v518 = vld [vmem:[%s358 + $0x21] sm:$0xff]
        %v519 = vld [vmem:[%s358 + $0x31] sm:$0xff]
        %v520 = vld [vmem:[%s358 + $0x41] sm:$0xff]
        %v521 = vld [vmem:[%s358 + $0x51] sm:$0xff]
        %v522 = vld [vmem:[%s358 + $0x61] sm:$0xff]
        %v523 = vld [vmem:[%s358 + $0x71] sm:$0xff]
        %v524 = vld [vmem:[%s358 + $0x2] sm:$0xff]
        %v525 = vld [vmem:[%s358 + $0x12] sm:$0xff]
        %v526 = vld [vmem:[%s358 + $0x22] sm:$0xff]
        %v527 = vld [vmem:[%s358 + $0x32] sm:$0xff]
        %v528 = vld [vmem:[%s358 + $0x42] sm:$0xff]
        %v529 = vld [vmem:[%s358 + $0x52] sm:$0xff]
        %v530 = vld [vmem:[%s358 + $0x62] sm:$0xff]
        %v531 = vld [vmem:[%s358 + $0x72] sm:$0xff]
        %s532 = scalar_lea.vmem %s358, 16
        %v533 = vld [vmem:[%s532] sm:$0xff]
        %v534 = vld [vmem:[%s532 + $0x10] sm:$0xff]
        %v535 = vld [vmem:[%s532 + $0x20] sm:$0xff]
        %v536 = vld [vmem:[%s532 + $0x30] sm:$0xff]
        %v537 = vld [vmem:[%s532 + $0x40] sm:$0xff]
        %v538 = vld [vmem:[%s532 + $0x50] sm:$0xff]
        %v539 = vld [vmem:[%s532 + $0x60] sm:$0xff]
        %v540 = vld [vmem:[%s532 + $0x70] sm:$0xff]
        %v541 = vld [vmem:[%s532 + $0x1] sm:$0xff]
        %v542 = vld [vmem:[%s532 + $0x11] sm:$0xff]
        %v543 = vld [vmem:[%s532 + $0x21] sm:$0xff]
        %v544 = vld [vmem:[%s532 + $0x31] sm:$0xff]
        %v545 = vld [vmem:[%s532 + $0x41] sm:$0xff]
        %v546 = vld [vmem:[%s532 + $0x51] sm:$0xff]
        %v547 = vld [vmem:[%s532 + $0x61] sm:$0xff]
        %v548 = vld [vmem:[%s532 + $0x71] sm:$0xff]
        %v549 = vld [vmem:[%s532 + $0x2] sm:$0xff]
        %v550 = vld [vmem:[%s532 + $0x12] sm:$0xff]
        %v551 = vld [vmem:[%s532 + $0x22] sm:$0xff]
        %v552 = vld [vmem:[%s532 + $0x32] sm:$0xff]
        %v553 = vld [vmem:[%s532 + $0x42] sm:$0xff]
        %v554 = vld [vmem:[%s532 + $0x52] sm:$0xff]
        %v555 = vld [vmem:[%s532 + $0x62] sm:$0xff]
        %v556 = vld [vmem:[%s532 + $0x72] sm:$0xff]
        %s557 = scalar_lea.vmem %s358, 32
        %v558 = vld [vmem:[%s557] sm:$0xff]
        %v559 = vld [vmem:[%s557 + $0x10] sm:$0xff]
        %v560 = vld [vmem:[%s557 + $0x20] sm:$0xff]
        %v561 = vld [vmem:[%s557 + $0x30] sm:$0xff]
        %v562 = vld [vmem:[%s557 + $0x40] sm:$0xff]
        %v563 = vld [vmem:[%s557 + $0x50] sm:$0xff]
        %v564 = vld [vmem:[%s557 + $0x60] sm:$0xff]
        %v565 = vld [vmem:[%s557 + $0x70] sm:$0xff]
        %v566 = vld [vmem:[%s557 + $0x1] sm:$0xff]
        %v567 = vld [vmem:[%s557 + $0x11] sm:$0xff]
        %v568 = vld [vmem:[%s557 + $0x21] sm:$0xff]
        %v569 = vld [vmem:[%s557 + $0x31] sm:$0xff]
        %v570 = vld [vmem:[%s557 + $0x41] sm:$0xff]
        %v571 = vld [vmem:[%s557 + $0x51] sm:$0xff]
        %v572 = vld [vmem:[%s557 + $0x61] sm:$0xff]
        %v573 = vld [vmem:[%s557 + $0x71] sm:$0xff]
        %v574 = vld [vmem:[%s557 + $0x2] sm:$0xff]
        %v575 = vld [vmem:[%s557 + $0x12] sm:$0xff]
        %v576 = vld [vmem:[%s557 + $0x22] sm:$0xff]
        %v577 = vld [vmem:[%s557 + $0x32] sm:$0xff]
        %v578 = vld [vmem:[%s557 + $0x42] sm:$0xff]
        %v579 = vld [vmem:[%s557 + $0x52] sm:$0xff]
        %v580 = vld [vmem:[%s557 + $0x62] sm:$0xff]
        %v581 = vld [vmem:[%s557 + $0x72] sm:$0xff]
        %590 = vrot.lane.b32.xlu0 %v368, 4
        %v591 = vpop.permute.xlu0 %590
        %592 = vrot.lane.b32.xlu0 %v369, 4
        %v593 = vpop.permute.xlu0 %592
        %594 = vrot.lane.b32.xlu0 %v370, 4
        %v595 = vpop.permute.xlu0 %594
        %596 = vrot.lane.b32.xlu0 %v371, 4
        %v597 = vpop.permute.xlu0 %596
        %598 = vrot.lane.b32.xlu0 %v372, 4
        %v599 = vpop.permute.xlu0 %598
        %600 = vrot.lane.b32.xlu0 %v373, 4
        %v601 = vpop.permute.xlu0 %600
        %602 = vrot.lane.b32.xlu0 %v374, 4
        %v603 = vpop.permute.xlu0 %602
        %604 = vrot.lane.b32.xlu0 %v375, 4
        %v605 = vpop.permute.xlu0 %604
        %622 = vrot.lane.b32.xlu0 %v376, 8
        %v623 = vpop.permute.xlu0 %622
        %624 = vrot.lane.b32.xlu0 %v377, 8
        %v625 = vpop.permute.xlu0 %624
        %626 = vrot.lane.b32.xlu0 %v378, 8
        %v627 = vpop.permute.xlu0 %626
        %628 = vrot.lane.b32.xlu0 %v379, 8
        %v629 = vpop.permute.xlu0 %628
        %630 = vrot.lane.b32.xlu0 %v380, 8
        %v631 = vpop.permute.xlu0 %630
        %632 = vrot.lane.b32.xlu0 %v381, 8
        %v633 = vpop.permute.xlu0 %632
        %634 = vrot.lane.b32.xlu0 %v382, 8
        %v635 = vpop.permute.xlu0 %634
        %636 = vrot.lane.b32.xlu0 %v383, 8
        %v637 = vpop.permute.xlu0 %636
        %654 = vrot.lane.b32.xlu0 %v385, 12
        %v655 = vpop.permute.xlu0 %654
        %656 = vrot.lane.b32.xlu0 %v386, 12
        %v657 = vpop.permute.xlu0 %656
        %658 = vrot.lane.b32.xlu0 %v387, 12
        %v659 = vpop.permute.xlu0 %658
        %660 = vrot.lane.b32.xlu0 %v388, 12
        %v661 = vpop.permute.xlu0 %660
        %662 = vrot.lane.b32.xlu0 %v389, 12
        %v663 = vpop.permute.xlu0 %662
        %664 = vrot.lane.b32.xlu0 %v390, 12
        %v665 = vpop.permute.xlu0 %664
        %666 = vrot.lane.b32.xlu0 %v391, 12
        %v667 = vpop.permute.xlu0 %666
        %668 = vrot.lane.b32.xlu0 %v392, 12
        %v669 = vpop.permute.xlu0 %668
        %686 = vrot.lane.b32.xlu0 %v393, 16
        %v687 = vpop.permute.xlu0 %686
        %688 = vrot.lane.b32.xlu0 %v394, 16
        %v689 = vpop.permute.xlu0 %688
        %690 = vrot.lane.b32.xlu0 %v395, 16
        %v691 = vpop.permute.xlu0 %690
        %692 = vrot.lane.b32.xlu0 %v396, 16
        %v693 = vpop.permute.xlu0 %692
        %694 = vrot.lane.b32.xlu0 %v397, 16
        %v695 = vpop.permute.xlu0 %694
        %696 = vrot.lane.b32.xlu0 %v398, 16
        %v697 = vpop.permute.xlu0 %696
        %698 = vrot.lane.b32.xlu0 %v399, 16
        %v699 = vpop.permute.xlu0 %698
        %700 = vrot.lane.b32.xlu0 %v400, 16
        %v701 = vpop.permute.xlu0 %700
        %718 = vrot.lane.b32.xlu0 %v401, 20
        %v719 = vpop.permute.xlu0 %718
        %720 = vrot.lane.b32.xlu0 %v402, 20
        %v721 = vpop.permute.xlu0 %720
        %722 = vrot.lane.b32.xlu0 %v403, 20
        %v723 = vpop.permute.xlu0 %722
        %724 = vrot.lane.b32.xlu0 %v404, 20
        %v725 = vpop.permute.xlu0 %724
        %726 = vrot.lane.b32.xlu0 %v405, 20
        %v727 = vpop.permute.xlu0 %726
        %728 = vrot.lane.b32.xlu0 %v406, 20
        %v729 = vpop.permute.xlu0 %728
        %730 = vrot.lane.b32.xlu0 %v407, 20
        %v731 = vpop.permute.xlu0 %730
        %732 = vrot.lane.b32.xlu0 %v408, 20
        %v733 = vpop.permute.xlu0 %732
        %750 = vrot.lane.b32.xlu0 %v410, 24
        %v751 = vpop.permute.xlu0 %750
        %752 = vrot.lane.b32.xlu0 %v411, 24
        %v753 = vpop.permute.xlu0 %752
        %754 = vrot.lane.b32.xlu0 %v412, 24
        %v755 = vpop.permute.xlu0 %754
        %756 = vrot.lane.b32.xlu0 %v413, 24
        %v757 = vpop.permute.xlu0 %756
        %758 = vrot.lane.b32.xlu0 %v414, 24
        %v759 = vpop.permute.xlu0 %758
        %760 = vrot.lane.b32.xlu0 %v415, 24
        %v761 = vpop.permute.xlu0 %760
        %762 = vrot.lane.b32.xlu0 %v416, 24
        %v763 = vpop.permute.xlu0 %762
        %764 = vrot.lane.b32.xlu0 %v417, 24
        %v765 = vpop.permute.xlu0 %764
        %782 = vrot.lane.b32.xlu0 %v418, 28
        %v783 = vpop.permute.xlu0 %782
        %784 = vrot.lane.b32.xlu0 %v419, 28
        %v785 = vpop.permute.xlu0 %784
        %786 = vrot.lane.b32.xlu0 %v420, 28
        %v787 = vpop.permute.xlu0 %786
        %788 = vrot.lane.b32.xlu0 %v421, 28
        %v789 = vpop.permute.xlu0 %788
        %790 = vrot.lane.b32.xlu0 %v422, 28
        %v791 = vpop.permute.xlu0 %790
        %792 = vrot.lane.b32.xlu0 %v423, 28
        %v793 = vpop.permute.xlu0 %792
        %794 = vrot.lane.b32.xlu0 %v424, 28
        %v795 = vpop.permute.xlu0 %794
        %796 = vrot.lane.b32.xlu0 %v425, 28
        %v797 = vpop.permute.xlu0 %796
        %814 = vrot.lane.b32.xlu0 %v426, 32
        %v815 = vpop.permute.xlu0 %814
        %816 = vrot.lane.b32.xlu0 %v427, 32
        %v817 = vpop.permute.xlu0 %816
        %818 = vrot.lane.b32.xlu0 %v428, 32
        %v819 = vpop.permute.xlu0 %818
        %820 = vrot.lane.b32.xlu0 %v429, 32
        %v821 = vpop.permute.xlu0 %820
        %822 = vrot.lane.b32.xlu0 %v430, 32
        %v823 = vpop.permute.xlu0 %822
        %824 = vrot.lane.b32.xlu0 %v431, 32
        %v825 = vpop.permute.xlu0 %824
        %826 = vrot.lane.b32.xlu0 %v432, 32
        %v827 = vpop.permute.xlu0 %826
        %828 = vrot.lane.b32.xlu0 %v433, 32
        %v829 = vpop.permute.xlu0 %828
        %846 = vrot.lane.b32.xlu0 %v434, 36
        %v847 = vpop.permute.xlu0 %846
        %848 = vrot.lane.b32.xlu0 %v435, 36
        %v849 = vpop.permute.xlu0 %848
        %850 = vrot.lane.b32.xlu0 %v436, 36
        %v851 = vpop.permute.xlu0 %850
        %852 = vrot.lane.b32.xlu0 %v437, 36
        %v853 = vpop.permute.xlu0 %852
        %854 = vrot.lane.b32.xlu0 %v438, 36
        %v855 = vpop.permute.xlu0 %854
        %856 = vrot.lane.b32.xlu0 %v439, 36
        %v857 = vpop.permute.xlu0 %856
        %858 = vrot.lane.b32.xlu0 %v440, 36
        %v859 = vpop.permute.xlu0 %858
        %860 = vrot.lane.b32.xlu0 %v441, 36
        %v861 = vpop.permute.xlu0 %860
        %878 = vrot.lane.b32.xlu0 %v442, 40
        %v879 = vpop.permute.xlu0 %878
        %880 = vrot.lane.b32.xlu0 %v443, 40
        %v881 = vpop.permute.xlu0 %880
        %882 = vrot.lane.b32.xlu0 %v444, 40
        %v883 = vpop.permute.xlu0 %882
        %884 = vrot.lane.b32.xlu0 %v445, 40
        %v885 = vpop.permute.xlu0 %884
        %886 = vrot.lane.b32.xlu0 %v446, 40
        %v887 = vpop.permute.xlu0 %886
        %888 = vrot.lane.b32.xlu0 %v447, 40
        %v889 = vpop.permute.xlu0 %888
        %890 = vrot.lane.b32.xlu0 %v448, 40
        %v891 = vpop.permute.xlu0 %890
        %892 = vrot.lane.b32.xlu0 %v449, 40
        %v893 = vpop.permute.xlu0 %892
        %910 = vrot.lane.b32.xlu0 %v450, 44
        %v911 = vpop.permute.xlu0 %910
        %912 = vrot.lane.b32.xlu0 %v451, 44
        %v913 = vpop.permute.xlu0 %912
        %914 = vrot.lane.b32.xlu0 %v452, 44
        %v915 = vpop.permute.xlu0 %914
        %916 = vrot.lane.b32.xlu0 %v453, 44
        %v917 = vpop.permute.xlu0 %916
        %918 = vrot.lane.b32.xlu0 %v454, 44
        %v919 = vpop.permute.xlu0 %918
        %920 = vrot.lane.b32.xlu0 %v455, 44
        %v921 = vpop.permute.xlu0 %920
        %922 = vrot.lane.b32.xlu0 %v456, 44
        %v923 = vpop.permute.xlu0 %922
        %924 = vrot.lane.b32.xlu0 %v457, 44
        %v925 = vpop.permute.xlu0 %924
        %942 = vrot.lane.b32.xlu0 %v459, 48
        %v943 = vpop.permute.xlu0 %942
        %944 = vrot.lane.b32.xlu0 %v460, 48
        %v945 = vpop.permute.xlu0 %944
        %946 = vrot.lane.b32.xlu0 %v461, 48
        %v947 = vpop.permute.xlu0 %946
        %948 = vrot.lane.b32.xlu0 %v462, 48
        %v949 = vpop.permute.xlu0 %948
        %950 = vrot.lane.b32.xlu0 %v463, 48
        %v951 = vpop.permute.xlu0 %950
        %952 = vrot.lane.b32.xlu0 %v464, 48
        %v953 = vpop.permute.xlu0 %952
        %954 = vrot.lane.b32.xlu0 %v465, 48
        %v955 = vpop.permute.xlu0 %954
        %956 = vrot.lane.b32.xlu0 %v466, 48
        %v957 = vpop.permute.xlu0 %956
        %974 = vrot.lane.b32.xlu0 %v467, 52
        %v975 = vpop.permute.xlu0 %974
        %976 = vrot.lane.b32.xlu0 %v468, 52
        %v977 = vpop.permute.xlu0 %976
        %978 = vrot.lane.b32.xlu0 %v469, 52
        %v979 = vpop.permute.xlu0 %978
        %980 = vrot.lane.b32.xlu0 %v470, 52
        %v981 = vpop.permute.xlu0 %980
        %982 = vrot.lane.b32.xlu0 %v471, 52
        %v983 = vpop.permute.xlu0 %982
        %984 = vrot.lane.b32.xlu0 %v472, 52
        %v985 = vpop.permute.xlu0 %984
        %986 = vrot.lane.b32.xlu0 %v473, 52
        %v987 = vpop.permute.xlu0 %986
        %988 = vrot.lane.b32.xlu0 %v474, 52
        %v989 = vpop.permute.xlu0 %988
        %1006 = vrot.lane.b32.xlu0 %v475, 56
        %v1007 = vpop.permute.xlu0 %1006
        %1008 = vrot.lane.b32.xlu0 %v476, 56
        %v1009 = vpop.permute.xlu0 %1008
        %1010 = vrot.lane.b32.xlu0 %v477, 56
        %v1011 = vpop.permute.xlu0 %1010
        %1012 = vrot.lane.b32.xlu0 %v478, 56
        %v1013 = vpop.permute.xlu0 %1012
        %1014 = vrot.lane.b32.xlu0 %v479, 56
        %v1015 = vpop.permute.xlu0 %1014
        %1016 = vrot.lane.b32.xlu0 %v480, 56
        %v1017 = vpop.permute.xlu0 %1016
        %1018 = vrot.lane.b32.xlu0 %v481, 56
        %v1019 = vpop.permute.xlu0 %1018
        %1020 = vrot.lane.b32.xlu0 %v482, 56
        %v1021 = vpop.permute.xlu0 %1020
        %1038 = vrot.lane.b32.xlu0 %v484, 60
        %v1039 = vpop.permute.xlu0 %1038
        %1040 = vrot.lane.b32.xlu0 %v485, 60
        %v1041 = vpop.permute.xlu0 %1040
        %1042 = vrot.lane.b32.xlu0 %v486, 60
        %v1043 = vpop.permute.xlu0 %1042
        %1044 = vrot.lane.b32.xlu0 %v487, 60
        %v1045 = vpop.permute.xlu0 %1044
        %1046 = vrot.lane.b32.xlu0 %v488, 60
        %v1047 = vpop.permute.xlu0 %1046
        %1048 = vrot.lane.b32.xlu0 %v489, 60
        %v1049 = vpop.permute.xlu0 %1048
        %1050 = vrot.lane.b32.xlu0 %v490, 60
        %v1051 = vpop.permute.xlu0 %1050
        %1052 = vrot.lane.b32.xlu0 %v491, 60
        %v1053 = vpop.permute.xlu0 %1052
        %vm1062 = vcmask 31744
        %v1063 = vsel %vm1062, %v360, %v591
        %v1064 = vsel %vm1062, %v361, %v593
        %v1065 = vsel %vm1062, %v362, %v595
        %v1066 = vsel %vm1062, %v363, %v597
        %v1067 = vsel %vm1062, %v364, %v599
        %v1068 = vsel %vm1062, %v365, %v601
        %v1069 = vsel %vm1062, %v366, %v603
        %v1070 = vsel %vm1062, %v367, %v605
        %vm1071 = vcmask 64512
        %v1072 = vsel %vm1071, %v1063, %v623
        %v1073 = vsel %vm1071, %v1064, %v625
        %v1074 = vsel %vm1071, %v1065, %v627
        %v1075 = vsel %vm1071, %v1066, %v629
        %v1076 = vsel %vm1071, %v1067, %v631
        %v1077 = vsel %vm1071, %v1068, %v633
        %v1078 = vsel %vm1071, %v1069, %v635
        %v1079 = vsel %vm1071, %v1070, %v637
        %vm1080 = vcmask 97280
        %v1081 = vsel %vm1080, %v1072, %v655
        %v1082 = vsel %vm1080, %v1073, %v657
        %v1083 = vsel %vm1080, %v1074, %v659
        %v1084 = vsel %vm1080, %v1075, %v661
        %v1085 = vsel %vm1080, %v1076, %v663
        %v1086 = vsel %vm1080, %v1077, %v665
        %v1087 = vsel %vm1080, %v1078, %v667
        %v1088 = vsel %vm1080, %v1079, %v669
        %vm1089 = vcmask 130048
        %v1090 = vsel %vm1089, %v1081, %v687
        %v1091 = vsel %vm1089, %v1082, %v689
        %v1092 = vsel %vm1089, %v1083, %v691
        %v1093 = vsel %vm1089, %v1084, %v693
        %v1094 = vsel %vm1089, %v1085, %v695
        %v1095 = vsel %vm1089, %v1086, %v697
        %v1096 = vsel %vm1089, %v1087, %v699
        %v1097 = vsel %vm1089, %v1088, %v701
        %vm1098 = vcmask 162816
        %v1099 = vsel %vm1098, %v1090, %v719
        %v1100 = vsel %vm1098, %v1091, %v721
        %v1101 = vsel %vm1098, %v1092, %v723
        %v1102 = vsel %vm1098, %v1093, %v725
        %v1103 = vsel %vm1098, %v1094, %v727
        %v1104 = vsel %vm1098, %v1095, %v729
        %v1105 = vsel %vm1098, %v1096, %v731
        %v1106 = vsel %vm1098, %v1097, %v733
        %vm1107 = vcmask 195584
        %v1108 = vsel %vm1107, %v1099, %v751
        %v1109 = vsel %vm1107, %v1100, %v753
        %v1110 = vsel %vm1107, %v1101, %v755
        %v1111 = vsel %vm1107, %v1102, %v757
        %v1112 = vsel %vm1107, %v1103, %v759
        %v1113 = vsel %vm1107, %v1104, %v761
        %v1114 = vsel %vm1107, %v1105, %v763
        %v1115 = vsel %vm1107, %v1106, %v765
        %vm1116 = vcmask 228352
        %v1117 = vsel %vm1116, %v1108, %v783
        %v1118 = vsel %vm1116, %v1109, %v785
        %v1119 = vsel %vm1116, %v1110, %v787
        %v1120 = vsel %vm1116, %v1111, %v789
        %v1121 = vsel %vm1116, %v1112, %v791
        %v1122 = vsel %vm1116, %v1113, %v793
        %v1123 = vsel %vm1116, %v1114, %v795
        %v1124 = vsel %vm1116, %v1115, %v797
        %vm1125 = vcmask 261120
        %v1126 = vsel %vm1125, %v1117, %v815
        %v1127 = vsel %vm1125, %v1118, %v817
        %v1128 = vsel %vm1125, %v1119, %v819
        %v1129 = vsel %vm1125, %v1120, %v821
        %v1130 = vsel %vm1125, %v1121, %v823
        %v1131 = vsel %vm1125, %v1122, %v825
        %v1132 = vsel %vm1125, %v1123, %v827
        %v1133 = vsel %vm1125, %v1124, %v829
        %vm1134 = vcmask 293888
        %v1135 = vsel %vm1134, %v1126, %v847
        %v1136 = vsel %vm1134, %v1127, %v849
        %v1137 = vsel %vm1134, %v1128, %v851
        %v1138 = vsel %vm1134, %v1129, %v853
        %v1139 = vsel %vm1134, %v1130, %v855
        %v1140 = vsel %vm1134, %v1131, %v857
        %v1141 = vsel %vm1134, %v1132, %v859
        %v1142 = vsel %vm1134, %v1133, %v861
        %vm1143 = vcmask 326656
        %v1144 = vsel %vm1143, %v1135, %v879
        %v1145 = vsel %vm1143, %v1136, %v881
        %v1146 = vsel %vm1143, %v1137, %v883
        %v1147 = vsel %vm1143, %v1138, %v885
        %v1148 = vsel %vm1143, %v1139, %v887
        %v1149 = vsel %vm1143, %v1140, %v889
        %v1150 = vsel %vm1143, %v1141, %v891
        %v1151 = vsel %vm1143, %v1142, %v893
        %vm1152 = vcmask 359424
        %v1153 = vsel %vm1152, %v1144, %v911
        %v1154 = vsel %vm1152, %v1145, %v913
        %v1155 = vsel %vm1152, %v1146, %v915
        %v1156 = vsel %vm1152, %v1147, %v917
        %v1157 = vsel %vm1152, %v1148, %v919
        %v1158 = vsel %vm1152, %v1149, %v921
        %v1159 = vsel %vm1152, %v1150, %v923
        %v1160 = vsel %vm1152, %v1151, %v925
        %vm1161 = vcmask 392192
        %v1162 = vsel %vm1161, %v1153, %v943
        %v1163 = vsel %vm1161, %v1154, %v945
        %v1164 = vsel %vm1161, %v1155, %v947
        %v1165 = vsel %vm1161, %v1156, %v949
        %v1166 = vsel %vm1161, %v1157, %v951
        %v1167 = vsel %vm1161, %v1158, %v953
        %v1168 = vsel %vm1161, %v1159, %v955
        %v1169 = vsel %vm1161, %v1160, %v957
        %vm1170 = vcmask 424960
        %v1171 = vsel %vm1170, %v1162, %v975
        %v1172 = vsel %vm1170, %v1163, %v977
        %v1173 = vsel %vm1170, %v1164, %v979
        %v1174 = vsel %vm1170, %v1165, %v981
        %v1175 = vsel %vm1170, %v1166, %v983
        %v1176 = vsel %vm1170, %v1167, %v985
        %v1177 = vsel %vm1170, %v1168, %v987
        %v1178 = vsel %vm1170, %v1169, %v989
        %vm1179 = vcmask 457728
        %v1180 = vsel %vm1179, %v1171, %v1007
        %v1181 = vsel %vm1179, %v1172, %v1009
        %v1182 = vsel %vm1179, %v1173, %v1011
        %v1183 = vsel %vm1179, %v1174, %v1013
        %v1184 = vsel %vm1179, %v1175, %v1015
        %v1185 = vsel %vm1179, %v1176, %v1017
        %v1186 = vsel %vm1179, %v1177, %v1019
        %v1187 = vsel %vm1179, %v1178, %v1021
        %vm1188 = vcmask 490496
        %v1189 = vsel %vm1188, %v1180, %v1039
        %v1190 = vsel %vm1188, %v1181, %v1041
        %v1191 = vsel %vm1188, %v1182, %v1043
        %v1192 = vsel %vm1188, %v1183, %v1045
        %v1193 = vsel %vm1188, %v1184, %v1047
        %v1194 = vsel %vm1188, %v1185, %v1049
        %v1195 = vsel %vm1188, %v1186, %v1051
        %v1196 = vsel %vm1188, %v1187, %v1053
        %1205 = vrot.lane.b32.xlu0 %v500, 4
        %v1206 = vpop.permute.xlu0 %1205
        %1207 = vrot.lane.b32.xlu0 %v501, 4
        %v1208 = vpop.permute.xlu0 %1207
        %1209 = vrot.lane.b32.xlu0 %v502, 4
        %v1210 = vpop.permute.xlu0 %1209
        %1211 = vrot.lane.b32.xlu0 %v503, 4
        %v1212 = vpop.permute.xlu0 %1211
        %1213 = vrot.lane.b32.xlu0 %v504, 4
        %v1214 = vpop.permute.xlu0 %1213
        %1215 = vrot.lane.b32.xlu0 %v505, 4
        %v1216 = vpop.permute.xlu0 %1215
        %1217 = vrot.lane.b32.xlu0 %v506, 4
        %v1218 = vpop.permute.xlu0 %1217
        %1219 = vrot.lane.b32.xlu0 %v507, 4
        %v1220 = vpop.permute.xlu0 %1219
        %1237 = vrot.lane.b32.xlu0 %v508, 8
        %v1238 = vpop.permute.xlu0 %1237
        %1239 = vrot.lane.b32.xlu0 %v509, 8
        %v1240 = vpop.permute.xlu0 %1239
        %1241 = vrot.lane.b32.xlu0 %v510, 8
        %v1242 = vpop.permute.xlu0 %1241
        %1243 = vrot.lane.b32.xlu0 %v511, 8
        %v1244 = vpop.permute.xlu0 %1243
        %1245 = vrot.lane.b32.xlu0 %v512, 8
        %v1246 = vpop.permute.xlu0 %1245
        %1247 = vrot.lane.b32.xlu0 %v513, 8
        %v1248 = vpop.permute.xlu0 %1247
        %1249 = vrot.lane.b32.xlu0 %v514, 8
        %v1250 = vpop.permute.xlu0 %1249
        %1251 = vrot.lane.b32.xlu0 %v515, 8
        %v1252 = vpop.permute.xlu0 %1251
        %1269 = vrot.lane.b32.xlu0 %v516, 12
        %v1270 = vpop.permute.xlu0 %1269
        %1271 = vrot.lane.b32.xlu0 %v517, 12
        %v1272 = vpop.permute.xlu0 %1271
        %1273 = vrot.lane.b32.xlu0 %v518, 12
        %v1274 = vpop.permute.xlu0 %1273
        %1275 = vrot.lane.b32.xlu0 %v519, 12
        %v1276 = vpop.permute.xlu0 %1275
        %1277 = vrot.lane.b32.xlu0 %v520, 12
        %v1278 = vpop.permute.xlu0 %1277
        %1279 = vrot.lane.b32.xlu0 %v521, 12
        %v1280 = vpop.permute.xlu0 %1279
        %1281 = vrot.lane.b32.xlu0 %v522, 12
        %v1282 = vpop.permute.xlu0 %1281
        %1283 = vrot.lane.b32.xlu0 %v523, 12
        %v1284 = vpop.permute.xlu0 %1283
        %1301 = vrot.lane.b32.xlu0 %v524, 16
        %v1302 = vpop.permute.xlu0 %1301
        %1303 = vrot.lane.b32.xlu0 %v525, 16
        %v1304 = vpop.permute.xlu0 %1303
        %1305 = vrot.lane.b32.xlu0 %v526, 16
        %v1306 = vpop.permute.xlu0 %1305
        %1307 = vrot.lane.b32.xlu0 %v527, 16
        %v1308 = vpop.permute.xlu0 %1307
        %1309 = vrot.lane.b32.xlu0 %v528, 16
        %v1310 = vpop.permute.xlu0 %1309
        %1311 = vrot.lane.b32.xlu0 %v529, 16
        %v1312 = vpop.permute.xlu0 %1311
        %1313 = vrot.lane.b32.xlu0 %v530, 16
        %v1314 = vpop.permute.xlu0 %1313
        %1315 = vrot.lane.b32.xlu0 %v531, 16
        %v1316 = vpop.permute.xlu0 %1315
        %1333 = vrot.lane.b32.xlu0 %v533, 20
        %v1334 = vpop.permute.xlu0 %1333
        %1335 = vrot.lane.b32.xlu0 %v534, 20
        %v1336 = vpop.permute.xlu0 %1335
        %1337 = vrot.lane.b32.xlu0 %v535, 20
        %v1338 = vpop.permute.xlu0 %1337
        %1339 = vrot.lane.b32.xlu0 %v536, 20
        %v1340 = vpop.permute.xlu0 %1339
        %1341 = vrot.lane.b32.xlu0 %v537, 20
        %v1342 = vpop.permute.xlu0 %1341
        %1343 = vrot.lane.b32.xlu0 %v538, 20
        %v1344 = vpop.permute.xlu0 %1343
        %1345 = vrot.lane.b32.xlu0 %v539, 20
        %v1346 = vpop.permute.xlu0 %1345
        %1347 = vrot.lane.b32.xlu0 %v540, 20
        %v1348 = vpop.permute.xlu0 %1347
        %1365 = vrot.lane.b32.xlu0 %v541, 24
        %v1366 = vpop.permute.xlu0 %1365
        %1367 = vrot.lane.b32.xlu0 %v542, 24
        %v1368 = vpop.permute.xlu0 %1367
        %1369 = vrot.lane.b32.xlu0 %v543, 24
        %v1370 = vpop.permute.xlu0 %1369
        %1371 = vrot.lane.b32.xlu0 %v544, 24
        %v1372 = vpop.permute.xlu0 %1371
        %1373 = vrot.lane.b32.xlu0 %v545, 24
        %v1374 = vpop.permute.xlu0 %1373
        %1375 = vrot.lane.b32.xlu0 %v546, 24
        %v1376 = vpop.permute.xlu0 %1375
        %1377 = vrot.lane.b32.xlu0 %v547, 24
        %v1378 = vpop.permute.xlu0 %1377
        %1379 = vrot.lane.b32.xlu0 %v548, 24
        %v1380 = vpop.permute.xlu0 %1379
        %1397 = vrot.lane.b32.xlu0 %v549, 28
        %v1398 = vpop.permute.xlu0 %1397
        %1399 = vrot.lane.b32.xlu0 %v550, 28
        %v1400 = vpop.permute.xlu0 %1399
        %1401 = vrot.lane.b32.xlu0 %v551, 28
        %v1402 = vpop.permute.xlu0 %1401
        %1403 = vrot.lane.b32.xlu0 %v552, 28
        %v1404 = vpop.permute.xlu0 %1403
        %1405 = vrot.lane.b32.xlu0 %v553, 28
        %v1406 = vpop.permute.xlu0 %1405
        %1407 = vrot.lane.b32.xlu0 %v554, 28
        %v1408 = vpop.permute.xlu0 %1407
        %1409 = vrot.lane.b32.xlu0 %v555, 28
        %v1410 = vpop.permute.xlu0 %1409
        %1411 = vrot.lane.b32.xlu0 %v556, 28
        %v1412 = vpop.permute.xlu0 %1411
        %1429 = vrot.lane.b32.xlu0 %v558, 32
        %v1430 = vpop.permute.xlu0 %1429
        %1431 = vrot.lane.b32.xlu0 %v559, 32
        %v1432 = vpop.permute.xlu0 %1431
        %1433 = vrot.lane.b32.xlu0 %v560, 32
        %v1434 = vpop.permute.xlu0 %1433
        %1435 = vrot.lane.b32.xlu0 %v561, 32
        %v1436 = vpop.permute.xlu0 %1435
        %1437 = vrot.lane.b32.xlu0 %v562, 32
        %v1438 = vpop.permute.xlu0 %1437
        %1439 = vrot.lane.b32.xlu0 %v563, 32
        %v1440 = vpop.permute.xlu0 %1439
        %1441 = vrot.lane.b32.xlu0 %v564, 32
        %v1442 = vpop.permute.xlu0 %1441
        %1443 = vrot.lane.b32.xlu0 %v565, 32
        %v1444 = vpop.permute.xlu0 %1443
        %1461 = vrot.lane.b32.xlu0 %v566, 36
        %v1462 = vpop.permute.xlu0 %1461
        %1463 = vrot.lane.b32.xlu0 %v567, 36
        %v1464 = vpop.permute.xlu0 %1463
        %1465 = vrot.lane.b32.xlu0 %v568, 36
        %v1466 = vpop.permute.xlu0 %1465
        %1467 = vrot.lane.b32.xlu0 %v569, 36
        %v1468 = vpop.permute.xlu0 %1467
        %1469 = vrot.lane.b32.xlu0 %v570, 36
        %v1470 = vpop.permute.xlu0 %1469
        %1471 = vrot.lane.b32.xlu0 %v571, 36
        %v1472 = vpop.permute.xlu0 %1471
        %1473 = vrot.lane.b32.xlu0 %v572, 36
        %v1474 = vpop.permute.xlu0 %1473
        %1475 = vrot.lane.b32.xlu0 %v573, 36
        %v1476 = vpop.permute.xlu0 %1475
        %1493 = vrot.lane.b32.xlu0 %v574, 40
        %v1494 = vpop.permute.xlu0 %1493
        %1495 = vrot.lane.b32.xlu0 %v575, 40
        %v1496 = vpop.permute.xlu0 %1495
        %1497 = vrot.lane.b32.xlu0 %v576, 40
        %v1498 = vpop.permute.xlu0 %1497
        %1499 = vrot.lane.b32.xlu0 %v577, 40
        %v1500 = vpop.permute.xlu0 %1499
        %1501 = vrot.lane.b32.xlu0 %v578, 40
        %v1502 = vpop.permute.xlu0 %1501
        %1503 = vrot.lane.b32.xlu0 %v579, 40
        %v1504 = vpop.permute.xlu0 %1503
        %1505 = vrot.lane.b32.xlu0 %v580, 40
        %v1506 = vpop.permute.xlu0 %1505
        %1507 = vrot.lane.b32.xlu0 %v581, 40
        %v1508 = vpop.permute.xlu0 %1507
        %v1517 = vsel %vm1062, %v492, %v1206
        %v1518 = vsel %vm1062, %v493, %v1208
        %v1519 = vsel %vm1062, %v494, %v1210
        %v1520 = vsel %vm1062, %v495, %v1212
        %v1521 = vsel %vm1062, %v496, %v1214
        %v1522 = vsel %vm1062, %v497, %v1216
        %v1523 = vsel %vm1062, %v498, %v1218
        %v1524 = vsel %vm1062, %v499, %v1220
        %v1525 = vsel %vm1071, %v1517, %v1238
        %v1526 = vsel %vm1071, %v1518, %v1240
        %v1527 = vsel %vm1071, %v1519, %v1242
        %v1528 = vsel %vm1071, %v1520, %v1244
        %v1529 = vsel %vm1071, %v1521, %v1246
        %v1530 = vsel %vm1071, %v1522, %v1248
        %v1531 = vsel %vm1071, %v1523, %v1250
        %v1532 = vsel %vm1071, %v1524, %v1252
        %v1533 = vsel %vm1080, %v1525, %v1270
        %v1534 = vsel %vm1080, %v1526, %v1272
        %v1535 = vsel %vm1080, %v1527, %v1274
        %v1536 = vsel %vm1080, %v1528, %v1276
        %v1537 = vsel %vm1080, %v1529, %v1278
        %v1538 = vsel %vm1080, %v1530, %v1280
        %v1539 = vsel %vm1080, %v1531, %v1282
        %v1540 = vsel %vm1080, %v1532, %v1284
        %v1541 = vsel %vm1089, %v1533, %v1302
        %v1542 = vsel %vm1089, %v1534, %v1304
        %v1543 = vsel %vm1089, %v1535, %v1306
        %v1544 = vsel %vm1089, %v1536, %v1308
        %v1545 = vsel %vm1089, %v1537, %v1310
        %v1546 = vsel %vm1089, %v1538, %v1312
        %v1547 = vsel %vm1089, %v1539, %v1314
        %v1548 = vsel %vm1089, %v1540, %v1316
        %v1549 = vsel %vm1098, %v1541, %v1334
        %v1550 = vsel %vm1098, %v1542, %v1336
        %v1551 = vsel %vm1098, %v1543, %v1338
        %v1552 = vsel %vm1098, %v1544, %v1340
        %v1553 = vsel %vm1098, %v1545, %v1342
        %v1554 = vsel %vm1098, %v1546, %v1344
        %v1555 = vsel %vm1098, %v1547, %v1346
        %v1556 = vsel %vm1098, %v1548, %v1348
        %v1557 = vsel %vm1107, %v1549, %v1366
        %v1558 = vsel %vm1107, %v1550, %v1368
        %v1559 = vsel %vm1107, %v1551, %v1370
        %v1560 = vsel %vm1107, %v1552, %v1372
        %v1561 = vsel %vm1107, %v1553, %v1374
        %v1562 = vsel %vm1107, %v1554, %v1376
        %v1563 = vsel %vm1107, %v1555, %v1378
        %v1564 = vsel %vm1107, %v1556, %v1380
        %v1565 = vsel %vm1116, %v1557, %v1398
        %v1566 = vsel %vm1116, %v1558, %v1400
        %v1567 = vsel %vm1116, %v1559, %v1402
        %v1568 = vsel %vm1116, %v1560, %v1404
        %v1569 = vsel %vm1116, %v1561, %v1406
        %v1570 = vsel %vm1116, %v1562, %v1408
        %v1571 = vsel %vm1116, %v1563, %v1410
        %v1572 = vsel %vm1116, %v1564, %v1412
        %v1573 = vsel %vm1125, %v1565, %v1430
        %v1574 = vsel %vm1125, %v1566, %v1432
        %v1575 = vsel %vm1125, %v1567, %v1434
        %v1576 = vsel %vm1125, %v1568, %v1436
        %v1577 = vsel %vm1125, %v1569, %v1438
        %v1578 = vsel %vm1125, %v1570, %v1440
        %v1579 = vsel %vm1125, %v1571, %v1442
        %v1580 = vsel %vm1125, %v1572, %v1444
        %v1581 = vsel %vm1134, %v1573, %v1462
        %v1582 = vsel %vm1134, %v1574, %v1464
        %v1583 = vsel %vm1134, %v1575, %v1466
        %v1584 = vsel %vm1134, %v1576, %v1468
        %v1585 = vsel %vm1134, %v1577, %v1470
        %v1586 = vsel %vm1134, %v1578, %v1472
        %v1587 = vsel %vm1134, %v1579, %v1474
        %v1588 = vsel %vm1134, %v1580, %v1476
        %v1589 = vsel %vm1143, %v1581, %v1494
        %v1590 = vsel %vm1143, %v1582, %v1496
        %v1591 = vsel %vm1143, %v1583, %v1498
        %v1592 = vsel %vm1143, %v1584, %v1500
        %v1593 = vsel %vm1143, %v1585, %v1502
        %v1594 = vsel %vm1143, %v1586, %v1504
        %v1595 = vsel %vm1143, %v1587, %v1506
        %v1596 = vsel %vm1143, %v1588, %v1508
        %1605 = vrot.lane.b32.xlu0 %v1589, 64
        %v1606 = vpop.permute.xlu0 %1605
        %1607 = vrot.lane.b32.xlu0 %v1590, 64
        %v1608 = vpop.permute.xlu0 %1607
        %1609 = vrot.lane.b32.xlu0 %v1591, 64
        %v1610 = vpop.permute.xlu0 %1609
        %1611 = vrot.lane.b32.xlu0 %v1592, 64
        %v1612 = vpop.permute.xlu0 %1611
        %1613 = vrot.lane.b32.xlu0 %v1593, 64
        %v1614 = vpop.permute.xlu0 %1613
        %1615 = vrot.lane.b32.xlu0 %v1594, 64
        %v1616 = vpop.permute.xlu0 %1615
        %1617 = vrot.lane.b32.xlu0 %v1595, 64
        %v1618 = vpop.permute.xlu0 %1617
        %1619 = vrot.lane.b32.xlu0 %v1596, 64
        %v1620 = vpop.permute.xlu0 %1619
        %vm1629 = vcmask 523264
        %v1630 = vsel %vm1629, %v1189, %v1606
        %v1631 = vsel %vm1629, %v1190, %v1608
        %v1632 = vsel %vm1629, %v1191, %v1610
        %v1633 = vsel %vm1629, %v1192, %v1612
        %v1634 = vsel %vm1629, %v1193, %v1614
        %v1635 = vsel %vm1629, %v1194, %v1616
        %v1636 = vsel %vm1629, %v1195, %v1618
        %v1637 = vsel %vm1629, %v1196, %v1620
        %v1638 = vld [vmem:[%s3] sm:$0xff]
        %v1639 = vld [vmem:[%s3 + $0x8] sm:$0xff]
        %v1640 = vld [vmem:[%s3 + $0x10] sm:$0xff]
        %v1641 = vld [vmem:[%s3 + $0x18] sm:$0xff]
        %v1642 = vld [vmem:[%s3 + $0x20] sm:$0xff]
        %v1643 = vld [vmem:[%s3 + $0x28] sm:$0xff]
        %v1644 = vld [vmem:[%s3 + $0x30] sm:$0xff]
        %v1645 = vld [vmem:[%s3 + $0x38] sm:$0xff]
        %v1646 = vld [vmem:[%s3 + $0x40] sm:$0xff]
        %v1647 = vld [vmem:[%s3 + $0x48] sm:$0xff]
        %v1648 = vld [vmem:[%s3 + $0x50] sm:$0xff]
        %v1649 = vld [vmem:[%s3 + $0x58] sm:$0xff]
        %v1650 = vld [vmem:[%s3 + $0x60] sm:$0xff]
        %v1651 = vld [vmem:[%s3 + $0x68] sm:$0xf]
        %vm1652 = vcmask 883712
        %v1654 = vsel %vm1652, %v1630, 0
        %v1657 = vsel %vm1652, %v1631, 0
        %v1660 = vsel %vm1652, %v1632, 0
        %v1663 = vsel %vm1652, %v1633, 0
        %v1666 = vsel %vm1652, %v1634, 0
        %v1669 = vsel %vm1652, %v1635, 0
        %v1672 = vsel %vm1652, %v1636, 0
        %v1675 = vsel %vm1652, %v1637, 0
        %vm1677 = vcmask 1043456
        %v1679 = vsel %vm1677, %v1651, 0
        %1681 = vmatprep.subr.mxu0 0.0
        %1682 = vmatpush1.msra.mxu0 0.0
        %1683 = vmatprep.subr.mxu0 0.0
        %1684 = vmatpush1.msra.mxu0 0.0
        %1685 = vmatprep.subr.mxu0 0.0
        %1686 = vmatpush1.msra.mxu0 %v1679
        %1687 = vmatprep.subr.mxu0 0.0
        %1688 = vmatpush1.msra.mxu0 %v1650
        %1689 = vmatprep.subr.mxu0 0.0
        %1690 = vmatpush1.msra.mxu0 %v1649
        %1691 = vmatprep.subr.mxu0 0.0
        %1692 = vmatpush1.msra.mxu0 %v1648
        %1693 = vmatprep.subr.mxu0 0.0
        %1694 = vmatpush1.msra.mxu0 %v1647
        %1695 = vmatprep.subr.mxu0 0.0
        %1696 = vmatpush1.msra.mxu0 %v1646
        %1697 = vmatprep.subr.mxu0 0.0
        %1698 = vmatpush1.msra.mxu0 %v1645
        %1699 = vmatprep.subr.mxu0 0.0
        %1700 = vmatpush1.msra.mxu0 %v1644
        %1701 = vmatprep.subr.mxu0 0.0
        %1702 = vmatpush1.msra.mxu0 %v1643
        %1703 = vmatprep.subr.mxu0 0.0
        %1704 = vmatpush1.msra.mxu0 %v1642
        %1705 = vmatprep.subr.mxu0 0.0
        %1706 = vmatpush1.msra.mxu0 %v1641
        %1707 = vmatprep.subr.mxu0 0.0
        %1708 = vmatpush1.msra.mxu0 %v1640
        %1709 = vmatprep.subr.mxu0 0.0
        %1710 = vmatpush1.msra.mxu0 %v1639
        %1711 = vmatprep.subr.mxu0 0.0
        %1712 = vmatpush1.msra.mxu0 %v1638
        %1713 = vmatprep.subr.mxu0 0.0
        %1714 = vmatpush2.msra.mxu0 0.0
        %1715 = vmatprep.subr.mxu0 0.0
        %1716 = vmatpush2.msra.mxu0 0.0
        %1717 = vmatprep.subr.mxu0 0.0
        %1718 = vmatpush2.msra.mxu0 0.0
        %1719 = vmatprep.subr.mxu0 0.0
        %1720 = vmatpush2.msra.mxu0 0.0
        %1721 = vmatprep.subr.mxu0 0.0
        %1722 = vmatpush2.msra.mxu0 0.0
        %1723 = vmatprep.subr.mxu0 0.0
        %1724 = vmatpush2.msra.mxu0 0.0
        %1725 = vmatprep.subr.mxu0 0.0
        %1726 = vmatpush2.msra.mxu0 0.0
        %1727 = vmatprep.subr.mxu0 0.0
        %1728 = vmatpush2.msra.mxu0 0.0
        %1729 = vmatprep.subr.mxu0 0.0
        %1730 = vmatpush2.msra.mxu0 0.0
        %1731 = vmatprep.subr.mxu0 0.0
        %1732 = vmatpush2.msra.mxu0 0.0
        %1733 = vmatprep.subr.mxu0 0.0
        %1734 = vmatpush2.msra.mxu0 0.0
        %1735 = vmatprep.subr.mxu0 0.0
        %1736 = vmatpush2.msra.mxu0 0.0
        %1737 = vmatprep.subr.mxu0 0.0
        %1738 = vmatpush2.msra.mxu0 0.0
        %1739 = vmatprep.subr.mxu0 0.0
        %1740 = vmatpush2.msra.mxu0 0.0
        %1741 = vmatprep.subr.mxu0 0.0
        %1742 = vmatpush2.msra.mxu0 0.0
        %1743 = vmatprep.subr.mxu0 0.0
        %1744 = vmatpush2.msra.mxu0 0.0
        %1745 = vmatprep.mubr.f32.mxu0 0.0
        %1746 = vmatmul.mubr.f32.gmra.mxu0 %v1654
        %v1747 = vpop.f32.mrf.mxu0
        %v1748 = vadd.f32 0.0, %v1747
        %v1749 = vpop.f32.mrf.mxu0
        %1750 = vmatprep.mubr.f32.mxu0 0.0
        %1751 = vmatmul.mubr.f32.gmra.mxu0 %v1657
        %v1752 = vpop.f32.mrf.mxu0
        %v1753 = vadd.f32 0.0, %v1752
        %v1754 = vpop.f32.mrf.mxu0
        %1755 = vmatprep.mubr.f32.mxu0 0.0
        %1756 = vmatmul.mubr.f32.gmra.mxu0 %v1660
        %v1757 = vpop.f32.mrf.mxu0
        %v1758 = vadd.f32 0.0, %v1757
        %v1759 = vpop.f32.mrf.mxu0
        %1760 = vmatprep.mubr.f32.mxu0 0.0
        %1761 = vmatmul.mubr.f32.gmra.mxu0 %v1663
        %v1762 = vpop.f32.mrf.mxu0
        %v1763 = vadd.f32 0.0, %v1762
        %v1764 = vpop.f32.mrf.mxu0
        %1765 = vmatprep.mubr.f32.mxu0 0.0
        %1766 = vmatmul.mubr.f32.gmra.mxu0 %v1666
        %v1767 = vpop.f32.mrf.mxu0
        %v1768 = vadd.f32 0.0, %v1767
        %v1769 = vpop.f32.mrf.mxu0
        %1770 = vmatprep.mubr.f32.mxu0 0.0
        %1771 = vmatmul.mubr.f32.gmra.mxu0 %v1669
        %v1772 = vpop.f32.mrf.mxu0
        %v1773 = vadd.f32 0.0, %v1772
        %v1774 = vpop.f32.mrf.mxu0
        %1775 = vmatprep.mubr.f32.mxu0 0.0
        %1776 = vmatmul.mubr.f32.gmra.mxu0 %v1672
        %v1777 = vpop.f32.mrf.mxu0
        %v1778 = vadd.f32 0.0, %v1777
        %v1779 = vpop.f32.mrf.mxu0
        %1780 = vmatprep.mubr.f32.mxu0 0.0
        %1781 = vmatmul.mubr.f32.gmra.mxu0 %v1675
        %v1782 = vpop.f32.mrf.mxu0
        %v1783 = vadd.f32 0.0, %v1782
        %v1784 = vpop.f32.mrf.mxu0
        %1785 = vdwg.mxu0
        %v1786 = vld [vmem:[%s4] sm:$0x1]
        %v1788 = vlaneseq
        %v1789 = vshrl.u32 %v1788, 7
        %v1790 = vsub.s32 0, %v1789
        %v1791 = vrot.slane %v1786, %v1790
        %v1793 = vmul.f32 %v1748, %v1791
        %v1794 = vmul.f32 %v1753, %v1791
        %v1795 = vmul.f32 %v1758, %v1791
        %v1796 = vmul.f32 %v1763, %v1791
        %v1797 = vmul.f32 %v1768, %v1791
        %v1798 = vmul.f32 %v1773, %v1791
        %v1799 = vmul.f32 %v1778, %v1791
        %v1800 = vmul.f32 %v1783, %v1791
        %v1801 = vld [vmem:[%s5] sm:$0x1]
        %v1803 = vlaneseq
        %v1804 = vshrl.u32 %v1803, 7
        %v1805 = vsub.s32 0, %v1804
        %v1806 = vrot.slane %v1801, %v1805
        %v1808 = vadd.f32 %v1793, %v1806
        %v1809 = vadd.f32 %v1794, %v1806
        %v1810 = vadd.f32 %v1795, %v1806
        %v1811 = vadd.f32 %v1796, %v1806
        %v1812 = vadd.f32 %v1797, %v1806
        %v1813 = vadd.f32 %v1798, %v1806
        %v1814 = vadd.f32 %v1799, %v1806
        %v1815 = vadd.f32 %v1800, %v1806
        %v1816 = vmax.f32 %v1808, 0.0
        %v1817 = vmax.f32 %v1809, 0.0
        %v1818 = vmax.f32 %v1810, 0.0
        %v1819 = vmax.f32 %v1811, 0.0
        %v1820 = vmax.f32 %v1812, 0.0
        %v1821 = vmax.f32 %v1813, 0.0
        %v1822 = vmax.f32 %v1814, 0.0
        %v1823 = vmax.f32 %v1815, 0.0
        %1824 = vst [vmem:[%s328] sm:$0xff] %v1816
        %1825 = vst [vmem:[%s328 + $0x8] sm:$0xff] %v1817
        %1826 = vst [vmem:[%s328 + $0x10] sm:$0xff] %v1818
        %1827 = vst [vmem:[%s328 + $0x18] sm:$0xff] %v1819
        %1828 = vst [vmem:[%s328 + $0x20] sm:$0xff] %v1820
        %1829 = vst [vmem:[%s328 + $0x28] sm:$0xff] %v1821
        %1830 = vst [vmem:[%s328 + $0x30] sm:$0xff] %v1822
        %1831 = vst [vmem:[%s328 + $0x38] sm:$0xff] %v1823
        %s1832 = sand.u32 %s193, 1
        %s1833 = scalar_lea.sflag [#allocation3], %s1832
        %s1834 = sand.u32 %s193, 1
        %s1835 = smul.addr %s1834, 64
        %s1836 = scalar_lea.vmem [#allocation2], %s1835
        // Predicated region
        $region45: #{tpu_custom_call.1} parent=43 // pred_check
          %p1837 = pneg %p203
        $region46: #{tpu_custom_call.1} parent=43 // pred_check_branch
          %1839 = sbr.rel (%p1837) target = $region48
        $region47: #{tpu_custom_call.1} parent=43 // pred_region
          %s1841 = ssub.s32 1024, 1024
          %1842 = vsyncadd %s1833, %s1841
          %s1843 = smul.addr %s25, 8
          %s1844 = smul.addr %s24, 64
          %s1845 = sadd.s32 %s1843, %s1844
          %s1846 = smul.addr %s1845, 128
          %s1847 = scalar_lea.hbm %s6, %s1846
          %s1848 = sshll.u32 %s1836, 4
          %s1849 = int_to_ptr.vmem [resolvable:$true] %s1848
          %1854 = dma.vmem_to_hbm [thread:$0]  %s1849, 1024, %s1847, %s1833, 128, 128, 8
        $region48: #{tpu_custom_call.1} parent=43 // pred_fallthru
          _
      $region44: #{tpu_custom_call.1} parent=5 // pred_fallthru
        _
      %p1855 = scmp.le.s32.totalorder 2, %s15
      // Predicated region
      $region49: #{tpu_custom_call.1} parent=5 // pred_check
        %p1856 = pneg %p1855
      $region50: #{tpu_custom_call.1} parent=5 // pred_check_branch
        %1858 = sbr.rel (%p1856) target = $region52
      $region51: #{tpu_custom_call.1} parent=5 // pred_region
        %s1859 = ssub.s32 %s15, 2
        // Predicated region
        $region53: #{tpu_custom_call.1} parent=51 // pred_check
          %p1860 = pneg %p209
        $region54: #{tpu_custom_call.1} parent=51 // pred_check_branch
          %1862 = sbr.rel (%p1860) target = $region56
        $region55: #{tpu_custom_call.1} parent=51 // pred_region
          %s1863 = sand.u32 %s194, 1
          %s1864 = scalar_lea.sflag [#allocation3], %s1863
          %s1865 = sand.u32 %s194, 1
          %s1866 = smul.addr %s1865, 64
          %s1867 = scalar_lea.vmem [#allocation2], %s1866
          %1868 = dma.done %s1864, 1024
        $region56: #{tpu_custom_call.1} parent=51 // pred_fallthru
          _
      $region52: #{tpu_custom_call.1} parent=5 // pred_fallthru
        _
    $region6: #{tpu_custom_call.1} parent=1 // loop_footer
      %s19 = sadd.s32 1, %s15
    $region7: #{tpu_custom_call.1} parent=1 // loop_footer_branch
      %14 = sbr.rel target = $region3
    $region8: #{tpu_custom_call.1} parent=1 // loop_exit
      _
    %1869 = vsyncpa [#allocation3], 1
    %s1870 = scalar_lea.sflag [#allocation3], 1
    %1871 = vsyncpa %s1870, 1

</llo_original>
